<compile_context>
chip_gen: v6e
topology: v6e:2x2x1
jax: 0.10.0
libtpu: 0.0.40
codegen_flags: <defaults>
</compile_context>

<pallas_src>
import functools

import jax
import jax.numpy as jnp
import numpy as np
from jax.experimental import pallas as pl
from jax.experimental.pallas import tpu as pltpu

GROUPS = 8
EPS = 1e-5


def _group_norm_relu(h, gamma, beta, gsel2):
    # h: (C, P) f32; gamma/beta: (C, 1) f32.
    # gsel2: (2C, 2C) f32 block-diagonal same-group selector, pre-scaled by 1/(P*(C//G)):
    #   rows [:C] -> per-channel group mean, rows [C:] -> per-channel group mean-of-squares.
    C = h.shape[0]
    stacked = jnp.concatenate([h, h * h], axis=0)                        # (2C, P)
    part = jnp.dot(gsel2, stacked, preferred_element_type=jnp.float32)   # (2C, P)
    stats = jnp.sum(part, axis=1, keepdims=True)                         # (2C, 1)
    mean_c = stats[:C]
    var_c = stats[C:] - mean_c * mean_c        # biased variance (matches torch GroupNorm)
    rstd_c = jax.lax.rsqrt(var_c + EPS)
    return jnp.maximum((h - mean_c) * rstd_c * gamma + beta, 0.0)


def _downsample_kernel(W2, Cout,
                       p_ref, w1_ref, b1_ref, w2_ref, b2_ref,
                       g1_ref, be1_ref, g2_ref, be2_ref,
                       gsel_ref, tapmask_ref, out_ref):
    P = out_ref.shape[2]
    gsel2 = gsel_ref[...]

    # ---- conv1 (3x3, s2, p1) + residual 1x1 s2 conv: one fused bf16 MXU matmul ----
    hr = jnp.dot(w1_ref[...], p_ref[0],
                 preferred_element_type=jnp.float32) + b1_ref[...]       # (2*Cout, P)
    res = hr[Cout:]                                                      # residual branch
    h = _group_norm_relu(hr[:Cout], g1_ref[...], be1_ref[...], gsel2)    # GN(8) + ReLU

    # ---- conv2 (3x3, s1, p1): in-kernel im2col via 9 circular pixel shifts + masks,
    #      then ONE (Cout, 9*Cout) x (9*Cout, P) matmul ----
    taps = []
    for k in range(9):
        off = (k // 3 - 1) * W2 + (k % 3 - 1)        # flattened pixel offset of tap (dy, dx)
        s = off % P
        t = h if s == 0 else jnp.concatenate([h[:, s:], h[:, :s]], axis=1)  # t[:, p] = h[:, (p+off)%P]
        taps.append(t * tapmask_ref[k])              # zero out-of-image / wrapped pixels
    hcol = jnp.concatenate(taps, axis=0).astype(jnp.bfloat16)            # (9*Cout, P)
    acc = jnp.dot(w2_ref[...], hcol,
                  preferred_element_type=jnp.float32) + b2_ref[...]      # (Cout, P)

    # ---- add residual, GN(8), ReLU; channel-major store (NCHW reshape in wrapper is free) ----
    out = _group_norm_relu(acc + res, g2_ref[...], be2_ref[...], gsel2)
    out_ref[0] = out.astype(out_ref.dtype)


def downsample_block(x_nchw, params):
    w1, b1 = params["w1"], params["b1"]
    w2, b2 = params["w2"], params["b2"]
    wres, bres = params["wres"], params["bres"]
    g1, be1 = params["g1"], params["be1"]
    g2, be2 = params["g2"], params["be2"]

    N, Cin, H, W = x_nchw.shape
    Cout = w1.shape[0]
    H2, W2 = (H + 1) // 2, (W + 1) // 2
    P = H2 * W2
    G = GROUPS
    cg = Cout // G

    # ---- channel-major im2col for the strided conv (layout glue only, bf16 to halve HBM bytes) ----
    x_pad = jnp.pad(x_nchw, ((0, 0), (0, 0), (1, 1), (1, 1)))
    taps = [x_pad[:, :, ky:ky + 2 * H2:2, kx:kx + 2 * W2:2]
            for ky in range(3) for kx in range(3)]
    patches = jnp.stack(taps, axis=1).reshape(N, 9 * Cin, P).astype(jnp.bfloat16)

    # ---- fused conv1 + residual weight: (2*Cout, 9*Cin); residual rows use only the centre tap ----
    w1_mat = jnp.transpose(w1, (2, 3, 1, 0)).reshape(9 * Cin, Cout)       # rows ordered (ky,kx,cin)
    wres_mat = wres.reshape(Cout, Cin).T                                  # (Cin, Cout)
    wres_blk = jnp.zeros((9 * Cin, Cout), w1.dtype).at[4 * Cin:5 * Cin].set(wres_mat)
    w1aug = jnp.concatenate([w1_mat, wres_blk], axis=1).T.astype(jnp.bfloat16)   # (2*Cout, 9*Cin)
    b1aug = jnp.concatenate([b1, bres]).reshape(2 * Cout, 1)

    # conv2 as a single K = 9*Cout operand
    w2_mat = jnp.transpose(w2, (0, 2, 3, 1)).reshape(Cout, 9 * Cout).astype(jnp.bfloat16)

    # ---- precomputed constants (hoisted out of the kernel) ----
    grp = np.arange(Cout) // cg
    same = (grp[:, None] == grp[None, :]).astype(np.float32) / float(P * cg)   # (C, C)
    gsel2 = np.zeros((2 * Cout, 2 * Cout), np.float32)
    gsel2[:Cout, :Cout] = same
    gsel2[Cout:, Cout:] = same

    yy, xx = np.meshgrid(np.arange(H2), np.arange(W2), indexing="ij")
    tap_mask = np.stack(
        [((yy + dy >= 0) & (yy + dy < H2) & (xx + dx >= 0) & (xx + dx < W2)).reshape(1, P)
         for dy in (-1, 0, 1) for dx in (-1, 0, 1)], axis=0).astype(np.float32)  # (9, 1, P)

    col = lambda v: v.reshape(Cout, 1)
    const = lambda shape: pl.BlockSpec(shape, lambda n, _r=len(shape): (0,) * _r)

    kernel = functools.partial(_downsample_kernel, W2, Cout)
    out = pl.pallas_call(
        kernel,
        out_shape=jax.ShapeDtypeStruct((N, Cout, P), jnp.float32),
        grid_spec=pltpu.PrefetchScalarGridSpec(
            num_scalar_prefetch=0,
            grid=(N,),
            in_specs=[
                pl.BlockSpec((1, 9 * Cin, P), lambda n: (n, 0, 0)),   # im2col patches (bf16)
                const((2 * Cout, 9 * Cin)),                           # fused conv1+res weight
                const((2 * Cout, 1)),                                 # fused bias
                const((Cout, 9 * Cout)),                              # conv2 weight
                const((Cout, 1)),                                     # conv2 bias
                const((Cout, 1)), const((Cout, 1)),                   # gamma1, beta1
                const((Cout, 1)), const((Cout, 1)),                   # gamma_out, beta_out
                const((2 * Cout, 2 * Cout)),                          # GN group selector (1/n folded in)
                const((9, 1, P)),                                     # conv2 boundary masks
            ],
            out_specs=pl.BlockSpec((1, Cout, P), lambda n: (n, 0, 0)),
        ),
        compiler_params=pltpu.CompilerParams(dimension_semantics=("parallel",)),
    )(patches, w1aug, b1aug, w2_mat, col(b2), col(g1), col(be1), col(g2), col(be2),
      jnp.asarray(gsel2), jnp.asarray(tap_mask))

    # channel-major output -> NCHW via a free reshape (no transpose pass)
    return out.reshape(N, Cout, H2, W2)


# ---------------- pure-JAX reference (for correctness check) ----------------
def _conv_ref(x, w, b, stride, pad):
    y = jax.lax.conv_general_dilated(
        x, w, (stride, stride), [(pad, pad), (pad, pad)],
        dimension_numbers=("NCHW", "OIHW", "NCHW"))
    return y + b.reshape(1, -1, 1, 1)


def _gn_ref(x, gamma, beta, groups, eps=EPS):
    N, C, H, W = x.shape
    xg = x.reshape(N, groups, -1)
    m = xg.mean(axis=2, keepdims=True)
    v = xg.var(axis=2, keepdims=True)
    xn = ((xg - m) / jnp.sqrt(v + eps)).reshape(N, C, H, W)
    return xn * gamma.reshape(1, C, 1, 1) + beta.reshape(1, C, 1, 1)


def _ref_forward(x, p):
    h = _conv_ref(x, p["w1"], p["b1"], 2, 1)
    h = jnp.maximum(_gn_ref(h, p["g1"], p["be1"], GROUPS), 0.0)
    h = _conv_ref(h, p["w2"], p["b2"], 1, 1)
    r = _conv_ref(x, p["wres"], p["bres"], 2, 0)
    return jnp.maximum(_gn_ref(h + r, p["g2"], p["be2"], GROUPS), 0.0)


if __name__ == "__main__":
    key = jax.random.PRNGKey(0)
    N, Cin, H, W = 2, 4, 16, 16
    Cout = 32
    ks = jax.random.split(key, 11)
    params = {
        "w1": 0.1 * jax.random.normal(ks[0], (Cout, Cin, 3, 3), jnp.float32),
        "b1": 0.1 * jax.random.normal(ks[1], (Cout,), jnp.float32),
        "w2": 0.1 * jax.random.normal(ks[2], (Cout, Cout, 3, 3), jnp.float32),
        "b2": 0.1 * jax.random.normal(ks[3], (Cout,), jnp.float32),
        "wres": 0.1 * jax.random.normal(ks[4], (Cout, Cin, 1, 1), jnp.float32),
        "bres": 0.1 * jax.random.normal(ks[5], (Cout,), jnp.float32),
        "g1": 1.0 + 0.1 * jax.random.normal(ks[6], (Cout,), jnp.float32),
        "be1": 0.1 * jax.random.normal(ks[7], (Cout,), jnp.float32),
        "g2": 1.0 + 0.1 * jax.random.normal(ks[8], (Cout,), jnp.float32),
        "be2": 0.1 * jax.random.normal(ks[9], (Cout,), jnp.float32),
    }
    x = jax.random.normal(ks[10], (N, Cin, H, W), jnp.float32)

    out = jax.block_until_ready(downsample_block(x, params))
    ref = jax.block_until_ready(_ref_forward(x, params))

    assert out.shape == (N, Cout, H // 2, W // 2), out.shape
    # bf16 MXU operands (f32 accumulation) vs. f32 reference -> loosened tolerance.
    np.testing.assert_allclose(np.asarray(out), np.asarray(ref), rtol=5e-2, atol=5e-2)
    print("KERNEL_OK")
</pallas_src>

<mosaic_0001>
module attributes {stable_mosaic.version = 11 : i64} {
  func.func @_downsample_kernel(%arg0: i32, %arg1: memref<1x36x64xbf16, #tpu.memory_space<vmem>>, %arg2: memref<64x36xbf16, #tpu.memory_space<vmem>>, %arg3: memref<64x1xf32, #tpu.memory_space<vmem>>, %arg4: memref<32x288xbf16, #tpu.memory_space<vmem>>, %arg5: memref<32x1xf32, #tpu.memory_space<vmem>>, %arg6: memref<32x1xf32, #tpu.memory_space<vmem>>, %arg7: memref<32x1xf32, #tpu.memory_space<vmem>>, %arg8: memref<32x1xf32, #tpu.memory_space<vmem>>, %arg9: memref<32x1xf32, #tpu.memory_space<vmem>>, %arg10: memref<64x64xf32, #tpu.memory_space<vmem>>, %arg11: memref<9x1x64xf32, #tpu.memory_space<vmem>>, %arg12: memref<1x32x64xf32, #tpu.memory_space<vmem>>) attributes {dimension_semantics = [#tpu.dimension_semantics<parallel>], iteration_bounds = array<i64: 2>, scalar_prefetch = 0 : i64, scratch_operands = 0 : i64, tpu.core_type = #tpu.core_type<tc>, window_params = [{transform_indices = @transform_0, window_bounds = array<i64: 1, 36, 64>}, {pipeline_mode = #tpu.pipeline_mode<synchronous>, transform_indices = @transform_1, window_bounds = array<i64: 64, 36>}, {pipeline_mode = #tpu.pipeline_mode<synchronous>, transform_indices = @transform_2, window_bounds = array<i64: 64, 1>}, {pipeline_mode = #tpu.pipeline_mode<synchronous>, transform_indices = @transform_3, window_bounds = array<i64: 32, 288>}, {pipeline_mode = #tpu.pipeline_mode<synchronous>, transform_indices = @transform_4, window_bounds = array<i64: 32, 1>}, {pipeline_mode = #tpu.pipeline_mode<synchronous>, transform_indices = @transform_5, window_bounds = array<i64: 32, 1>}, {pipeline_mode = #tpu.pipeline_mode<synchronous>, transform_indices = @transform_6, window_bounds = array<i64: 32, 1>}, {pipeline_mode = #tpu.pipeline_mode<synchronous>, transform_indices = @transform_7, window_bounds = array<i64: 32, 1>}, {pipeline_mode = #tpu.pipeline_mode<synchronous>, transform_indices = @transform_8, window_bounds = array<i64: 32, 1>}, {pipeline_mode = #tpu.pipeline_mode<synchronous>, transform_indices = @transform_9, window_bounds = array<i64: 64, 64>}, {pipeline_mode = #tpu.pipeline_mode<synchronous>, transform_indices = @transform_10, window_bounds = array<i64: 9, 1, 64>}, {transform_indices = @transform_11, window_bounds = array<i64: 1, 32, 64>}]} {
    %c0 = arith.constant 0 : index
    %c0_0 = arith.constant 0 : index
    %0 = vector.load %arg10[%c0, %c0_0] : memref<64x64xf32, #tpu.memory_space<vmem>>, vector<64x64xf32>
    %c0_1 = arith.constant 0 : index
    %c0_2 = arith.constant 0 : index
    %1 = vector.load %arg2[%c0_1, %c0_2] : memref<64x36xbf16, #tpu.memory_space<vmem>>, vector<64x36xbf16>
    %c0_3 = arith.constant 0 : index
    %c0_4 = arith.constant 0 : index
    %c0_5 = arith.constant 0 : index
    %2 = vector.load %arg1[%c0_3, %c0_4, %c0_5] : memref<1x36x64xbf16, #tpu.memory_space<vmem>>, vector<1x36x64xbf16>
    %3 = vector.shape_cast %2 : vector<1x36x64xbf16> to vector<36x64xbf16>
    %cst = arith.constant dense<0.000000e+00> : vector<64x64xf32>
    %4 = tpu.matmul %1, %3, %cst {dimension_numbers = #tpu.dot_dimension_numbers<[1], [0], [0], [1], [0, 0, 1, 1], [], []>} : vector<64x36xbf16>, vector<36x64xbf16>, vector<64x64xf32> -> vector<64x64xf32>
    %c0_6 = arith.constant 0 : index
    %c0_7 = arith.constant 0 : index
    %5 = vector.load %arg3[%c0_6, %c0_7] : memref<64x1xf32, #tpu.memory_space<vmem>>, vector<64x1xf32>
    %6 = vector.broadcast %5 : vector<64x1xf32> to vector<64x64xf32>
    %7 = arith.addf %4, %6 : vector<64x64xf32>
    %8 = vector.extract_strided_slice %7 {offsets = [32, 0], sizes = [32, 64], strides = [1, 1]} : vector<64x64xf32> to vector<32x64xf32>
    %9 = vector.extract_strided_slice %7 {offsets = [0, 0], sizes = [32, 64], strides = [1, 1]} : vector<64x64xf32> to vector<32x64xf32>
    %c0_8 = arith.constant 0 : index
    %c0_9 = arith.constant 0 : index
    %10 = vector.load %arg6[%c0_8, %c0_9] : memref<32x1xf32, #tpu.memory_space<vmem>>, vector<32x1xf32>
    %c0_10 = arith.constant 0 : index
    %c0_11 = arith.constant 0 : index
    %11 = vector.load %arg7[%c0_10, %c0_11] : memref<32x1xf32, #tpu.memory_space<vmem>>, vector<32x1xf32>
    %12 = arith.mulf %9, %9 : vector<32x64xf32>
    %13 = tpu.concatenate %9, %12 in 0 : vector<32x64xf32>, vector<32x64xf32> -> vector<64x64xf32>
    %cst_12 = arith.constant dense<0.000000e+00> : vector<64x64xf32>
    %14 = tpu.matmul %0, %13, %cst_12 {dimension_numbers = #tpu.dot_dimension_numbers<[1], [0], [0], [1], [0, 0, 1, 1], [], []>} : vector<64x64xf32>, vector<64x64xf32>, vector<64x64xf32> -> vector<64x64xf32>
    %cst_13 = arith.constant dense<0.000000e+00> : vector<64xf32>
    %15 = vector.multi_reduction <add>, %14, %cst_13 [1] : vector<64x64xf32> to vector<64xf32>
    %16 = vector.shape_cast %15 : vector<64xf32> to vector<64x1xf32>
    %17 = vector.extract_strided_slice %16 {offsets = [0, 0], sizes = [32, 1], strides = [1, 1]} : vector<64x1xf32> to vector<32x1xf32>
    %18 = vector.extract_strided_slice %16 {offsets = [32, 0], sizes = [32, 1], strides = [1, 1]} : vector<64x1xf32> to vector<32x1xf32>
    %19 = arith.mulf %17, %17 : vector<32x1xf32>
    %20 = arith.subf %18, %19 : vector<32x1xf32>
    %cst_14 = arith.constant 9.99999974E-6 : f32
    %21 = vector.broadcast %cst_14 : f32 to vector<32x1xf32>
    %22 = arith.addf %20, %21 : vector<32x1xf32>
    %23 = math.rsqrt %22 : vector<32x1xf32>
    %24 = vector.broadcast %17 : vector<32x1xf32> to vector<32x64xf32>
    %25 = arith.subf %9, %24 : vector<32x64xf32>
    %26 = vector.broadcast %23 : vector<32x1xf32> to vector<32x64xf32>
    %27 = arith.mulf %25, %26 : vector<32x64xf32>
    %28 = vector.broadcast %10 : vector<32x1xf32> to vector<32x64xf32>
    %29 = arith.mulf %27, %28 : vector<32x64xf32>
    %30 = vector.broadcast %11 : vector<32x1xf32> to vector<32x64xf32>
    %31 = arith.addf %29, %30 : vector<32x64xf32>
    %cst_15 = arith.constant 0.000000e+00 : f32
    %32 = vector.broadcast %cst_15 : f32 to vector<32x64xf32>
    %33 = arith.maximumf %31, %32 : vector<32x64xf32>
    %34 = vector.extract_strided_slice %33 {offsets = [0, 55], sizes = [32, 9], strides = [1, 1]} : vector<32x64xf32> to vector<32x9xf32>
    %35 = vector.extract_strided_slice %33 {offsets = [0, 0], sizes = [32, 55], strides = [1, 1]} : vector<32x64xf32> to vector<32x55xf32>
    %36 = tpu.concatenate %34, %35 in 1 : vector<32x9xf32>, vector<32x55xf32> -> vector<32x64xf32>
    %c0_16 = arith.constant 0 : index
    %c0_17 = arith.constant 0 : index
    %c0_18 = arith.constant 0 : index
    %37 = vector.load %arg11[%c0_16, %c0_17, %c0_18] : memref<9x1x64xf32, #tpu.memory_space<vmem>>, vector<1x1x64xf32>
    %38 = vector.shape_cast %37 : vector<1x1x64xf32> to vector<1x64xf32>
    %39 = vector.broadcast %38 : vector<1x64xf32> to vector<32x64xf32>
    %40 = arith.mulf %36, %39 : vector<32x64xf32>
    %41 = vector.extract_strided_slice %33 {offsets = [0, 56], sizes = [32, 8], strides = [1, 1]} : vector<32x64xf32> to vector<32x8xf32>
    %42 = vector.extract_strided_slice %33 {offsets = [0, 0], sizes = [32, 56], strides = [1, 1]} : vector<32x64xf32> to vector<32x56xf32>
    %43 = tpu.concatenate %41, %42 in 1 : vector<32x8xf32>, vector<32x56xf32> -> vector<32x64xf32>
    %c1 = arith.constant 1 : index
    %c0_19 = arith.constant 0 : index
    %c0_20 = arith.constant 0 : index
    %44 = vector.load %arg11[%c1, %c0_19, %c0_20] : memref<9x1x64xf32, #tpu.memory_space<vmem>>, vector<1x1x64xf32>
    %45 = vector.shape_cast %44 : vector<1x1x64xf32> to vector<1x64xf32>
    %46 = vector.broadcast %45 : vector<1x64xf32> to vector<32x64xf32>
    %47 = arith.mulf %43, %46 : vector<32x64xf32>
    %48 = vector.extract_strided_slice %33 {offsets = [0, 57], sizes = [32, 7], strides = [1, 1]} : vector<32x64xf32> to vector<32x7xf32>
    %49 = vector.extract_strided_slice %33 {offsets = [0, 0], sizes = [32, 57], strides = [1, 1]} : vector<32x64xf32> to vector<32x57xf32>
    %50 = tpu.concatenate %48, %49 in 1 : vector<32x7xf32>, vector<32x57xf32> -> vector<32x64xf32>
    %c2 = arith.constant 2 : index
    %c0_21 = arith.constant 0 : index
    %c0_22 = arith.constant 0 : index
    %51 = vector.load %arg11[%c2, %c0_21, %c0_22] : memref<9x1x64xf32, #tpu.memory_space<vmem>>, vector<1x1x64xf32>
    %52 = vector.shape_cast %51 : vector<1x1x64xf32> to vector<1x64xf32>
    %53 = vector.broadcast %52 : vector<1x64xf32> to vector<32x64xf32>
    %54 = arith.mulf %50, %53 : vector<32x64xf32>
    %55 = vector.extract_strided_slice %33 {offsets = [0, 63], sizes = [32, 1], strides = [1, 1]} : vector<32x64xf32> to vector<32x1xf32>
    %56 = vector.extract_strided_slice %33 {offsets = [0, 0], sizes = [32, 63], strides = [1, 1]} : vector<32x64xf32> to vector<32x63xf32>
    %57 = tpu.concatenate %55, %56 in 1 : vector<32x1xf32>, vector<32x63xf32> -> vector<32x64xf32>
    %c3 = arith.constant 3 : index
    %c0_23 = arith.constant 0 : index
    %c0_24 = arith.constant 0 : index
    %58 = vector.load %arg11[%c3, %c0_23, %c0_24] : memref<9x1x64xf32, #tpu.memory_space<vmem>>, vector<1x1x64xf32>
    %59 = vector.shape_cast %58 : vector<1x1x64xf32> to vector<1x64xf32>
    %60 = vector.broadcast %59 : vector<1x64xf32> to vector<32x64xf32>
    %61 = arith.mulf %57, %60 : vector<32x64xf32>
    %c4 = arith.constant 4 : index
    %c0_25 = arith.constant 0 : index
    %c0_26 = arith.constant 0 : index
    %62 = vector.load %arg11[%c4, %c0_25, %c0_26] : memref<9x1x64xf32, #tpu.memory_space<vmem>>, vector<1x1x64xf32>
    %63 = vector.shape_cast %62 : vector<1x1x64xf32> to vector<1x64xf32>
    %64 = vector.broadcast %63 : vector<1x64xf32> to vector<32x64xf32>
    %65 = arith.mulf %33, %64 : vector<32x64xf32>
    %66 = vector.extract_strided_slice %33 {offsets = [0, 1], sizes = [32, 63], strides = [1, 1]} : vector<32x64xf32> to vector<32x63xf32>
    %67 = vector.extract_strided_slice %33 {offsets = [0, 0], sizes = [32, 1], strides = [1, 1]} : vector<32x64xf32> to vector<32x1xf32>
    %68 = tpu.concatenate %66, %67 in 1 : vector<32x63xf32>, vector<32x1xf32> -> vector<32x64xf32>
    %c5 = arith.constant 5 : index
    %c0_27 = arith.constant 0 : index
    %c0_28 = arith.constant 0 : index
    %69 = vector.load %arg11[%c5, %c0_27, %c0_28] : memref<9x1x64xf32, #tpu.memory_space<vmem>>, vector<1x1x64xf32>
    %70 = vector.shape_cast %69 : vector<1x1x64xf32> to vector<1x64xf32>
    %71 = vector.broadcast %70 : vector<1x64xf32> to vector<32x64xf32>
    %72 = arith.mulf %68, %71 : vector<32x64xf32>
    %73 = vector.extract_strided_slice %33 {offsets = [0, 7], sizes = [32, 57], strides = [1, 1]} : vector<32x64xf32> to vector<32x57xf32>
    %74 = vector.extract_strided_slice %33 {offsets = [0, 0], sizes = [32, 7], strides = [1, 1]} : vector<32x64xf32> to vector<32x7xf32>
    %75 = tpu.concatenate %73, %74 in 1 : vector<32x57xf32>, vector<32x7xf32> -> vector<32x64xf32>
    %c6 = arith.constant 6 : index
    %c0_29 = arith.constant 0 : index
    %c0_30 = arith.constant 0 : index
    %76 = vector.load %arg11[%c6, %c0_29, %c0_30] : memref<9x1x64xf32, #tpu.memory_space<vmem>>, vector<1x1x64xf32>
    %77 = vector.shape_cast %76 : vector<1x1x64xf32> to vector<1x64xf32>
    %78 = vector.broadcast %77 : vector<1x64xf32> to vector<32x64xf32>
    %79 = arith.mulf %75, %78 : vector<32x64xf32>
    %80 = vector.extract_strided_slice %33 {offsets = [0, 8], sizes = [32, 56], strides = [1, 1]} : vector<32x64xf32> to vector<32x56xf32>
    %81 = vector.extract_strided_slice %33 {offsets = [0, 0], sizes = [32, 8], strides = [1, 1]} : vector<32x64xf32> to vector<32x8xf32>
    %82 = tpu.concatenate %80, %81 in 1 : vector<32x56xf32>, vector<32x8xf32> -> vector<32x64xf32>
    %c7 = arith.constant 7 : index
    %c0_31 = arith.constant 0 : index
    %c0_32 = arith.constant 0 : index
    %83 = vector.load %arg11[%c7, %c0_31, %c0_32] : memref<9x1x64xf32, #tpu.memory_space<vmem>>, vector<1x1x64xf32>
    %84 = vector.shape_cast %83 : vector<1x1x64xf32> to vector<1x64xf32>
    %85 = vector.broadcast %84 : vector<1x64xf32> to vector<32x64xf32>
    %86 = arith.mulf %82, %85 : vector<32x64xf32>
    %87 = vector.extract_strided_slice %33 {offsets = [0, 9], sizes = [32, 55], strides = [1, 1]} : vector<32x64xf32> to vector<32x55xf32>
    %88 = vector.extract_strided_slice %33 {offsets = [0, 0], sizes = [32, 9], strides = [1, 1]} : vector<32x64xf32> to vector<32x9xf32>
    %89 = tpu.concatenate %87, %88 in 1 : vector<32x55xf32>, vector<32x9xf32> -> vector<32x64xf32>
    %c8 = arith.constant 8 : index
    %c0_33 = arith.constant 0 : index
    %c0_34 = arith.constant 0 : index
    %90 = vector.load %arg11[%c8, %c0_33, %c0_34] : memref<9x1x64xf32, #tpu.memory_space<vmem>>, vector<1x1x64xf32>
    %91 = vector.shape_cast %90 : vector<1x1x64xf32> to vector<1x64xf32>
    %92 = vector.broadcast %91 : vector<1x64xf32> to vector<32x64xf32>
    %93 = arith.mulf %89, %92 : vector<32x64xf32>
    %94 = tpu.concatenate %40, %47, %54, %61, %65, %72, %79, %86, %93 in 0 : vector<32x64xf32>, vector<32x64xf32>, vector<32x64xf32>, vector<32x64xf32>, vector<32x64xf32>, vector<32x64xf32>, vector<32x64xf32>, vector<32x64xf32>, vector<32x64xf32> -> vector<288x64xf32>
    %95 = arith.truncf %94 : vector<288x64xf32> to vector<288x64xbf16>
    %c0_35 = arith.constant 0 : index
    %c0_36 = arith.constant 0 : index
    %96 = vector.load %arg4[%c0_35, %c0_36] : memref<32x288xbf16, #tpu.memory_space<vmem>>, vector<32x288xbf16>
    %cst_37 = arith.constant dense<0.000000e+00> : vector<32x64xf32>
    %97 = tpu.matmul %96, %95, %cst_37 {dimension_numbers = #tpu.dot_dimension_numbers<[1], [0], [0], [1], [0, 0, 1, 1], [], []>} : vector<32x288xbf16>, vector<288x64xbf16>, vector<32x64xf32> -> vector<32x64xf32>
    %c0_38 = arith.constant 0 : index
    %c0_39 = arith.constant 0 : index
    %98 = vector.load %arg5[%c0_38, %c0_39] : memref<32x1xf32, #tpu.memory_space<vmem>>, vector<32x1xf32>
    %99 = vector.broadcast %98 : vector<32x1xf32> to vector<32x64xf32>
    %100 = arith.addf %97, %99 : vector<32x64xf32>
    %101 = arith.addf %100, %8 : vector<32x64xf32>
    %c0_40 = arith.constant 0 : index
    %c0_41 = arith.constant 0 : index
    %102 = vector.load %arg8[%c0_40, %c0_41] : memref<32x1xf32, #tpu.memory_space<vmem>>, vector<32x1xf32>
    %c0_42 = arith.constant 0 : index
    %c0_43 = arith.constant 0 : index
    %103 = vector.load %arg9[%c0_42, %c0_43] : memref<32x1xf32, #tpu.memory_space<vmem>>, vector<32x1xf32>
    %104 = arith.mulf %101, %101 : vector<32x64xf32>
    %105 = tpu.concatenate %101, %104 in 0 : vector<32x64xf32>, vector<32x64xf32> -> vector<64x64xf32>
    %cst_44 = arith.constant dense<0.000000e+00> : vector<64x64xf32>
    %106 = tpu.matmul %0, %105, %cst_44 {dimension_numbers = #tpu.dot_dimension_numbers<[1], [0], [0], [1], [0, 0, 1, 1], [], []>} : vector<64x64xf32>, vector<64x64xf32>, vector<64x64xf32> -> vector<64x64xf32>
    %cst_45 = arith.constant dense<0.000000e+00> : vector<64xf32>
    %107 = vector.multi_reduction <add>, %106, %cst_45 [1] : vector<64x64xf32> to vector<64xf32>
    %108 = vector.shape_cast %107 : vector<64xf32> to vector<64x1xf32>
    %109 = vector.extract_strided_slice %108 {offsets = [0, 0], sizes = [32, 1], strides = [1, 1]} : vector<64x1xf32> to vector<32x1xf32>
    %110 = vector.extract_strided_slice %108 {offsets = [32, 0], sizes = [32, 1], strides = [1, 1]} : vector<64x1xf32> to vector<32x1xf32>
    %111 = arith.mulf %109, %109 : vector<32x1xf32>
    %112 = arith.subf %110, %111 : vector<32x1xf32>
    %cst_46 = arith.constant 9.99999974E-6 : f32
    %113 = vector.broadcast %cst_46 : f32 to vector<32x1xf32>
    %114 = arith.addf %112, %113 : vector<32x1xf32>
    %115 = math.rsqrt %114 : vector<32x1xf32>
    %116 = vector.broadcast %109 : vector<32x1xf32> to vector<32x64xf32>
    %117 = arith.subf %101, %116 : vector<32x64xf32>
    %118 = vector.broadcast %115 : vector<32x1xf32> to vector<32x64xf32>
    %119 = arith.mulf %117, %118 : vector<32x64xf32>
    %120 = vector.broadcast %102 : vector<32x1xf32> to vector<32x64xf32>
    %121 = arith.mulf %119, %120 : vector<32x64xf32>
    %122 = vector.broadcast %103 : vector<32x1xf32> to vector<32x64xf32>
    %123 = arith.addf %121, %122 : vector<32x64xf32>
    %cst_47 = arith.constant 0.000000e+00 : f32
    %124 = vector.broadcast %cst_47 : f32 to vector<32x64xf32>
    %125 = arith.maximumf %123, %124 : vector<32x64xf32>
    %c0_48 = arith.constant 0 : index
    %c0_49 = arith.constant 0 : index
    %c0_50 = arith.constant 0 : index
    %126 = vector.load %arg12[%c0_48, %c0_49, %c0_50] : memref<1x32x64xf32, #tpu.memory_space<vmem>>, vector<1x32x64xf32>
    %127 = vector.shape_cast %126 : vector<1x32x64xf32> to vector<32x64xf32>
    %128 = vector.shape_cast %125 : vector<32x64xf32> to vector<1x32x64xf32>
    tpu.vector_store %arg12[%c0_48, %c0_49, %c0_50], %128 {strides = array<i32>} : memref<1x32x64xf32, #tpu.memory_space<vmem>>, vector<1x32x64xf32>,
    return
  }
  func.func @transform_0(%arg0: i32) -> (i32, i32, i32) {
    %c0_i32 = arith.constant 0 : i32
    %c0_i32_0 = arith.constant 0 : i32
    %c0_i32_1 = arith.constant 0 : i32
    return %arg0, %c0_i32, %c0_i32_0 : i32, i32, i32
  }
  func.func @transform_1(%arg0: i32) -> (i32, i32) {
    %c0_i32 = arith.constant 0 : i32
    %c0_i32_0 = arith.constant 0 : i32
    %c0_i32_1 = arith.constant 0 : i32
    return %c0_i32, %c0_i32_0 : i32, i32
  }
  func.func @transform_2(%arg0: i32) -> (i32, i32) {
    %c0_i32 = arith.constant 0 : i32
    %c0_i32_0 = arith.constant 0 : i32
    %c0_i32_1 = arith.constant 0 : i32
    return %c0_i32, %c0_i32_0 : i32, i32
  }
  func.func @transform_3(%arg0: i32) -> (i32, i32) {
    %c0_i32 = arith.constant 0 : i32
    %c0_i32_0 = arith.constant 0 : i32
    %c0_i32_1 = arith.constant 0 : i32
    return %c0_i32, %c0_i32_0 : i32, i32
  }
  func.func @transform_4(%arg0: i32) -> (i32, i32) {
    %c0_i32 = arith.constant 0 : i32
    %c0_i32_0 = arith.constant 0 : i32
    %c0_i32_1 = arith.constant 0 : i32
    return %c0_i32, %c0_i32_0 : i32, i32
  }
  func.func @transform_5(%arg0: i32) -> (i32, i32) {
    %c0_i32 = arith.constant 0 : i32
    %c0_i32_0 = arith.constant 0 : i32
    %c0_i32_1 = arith.constant 0 : i32
    return %c0_i32, %c0_i32_0 : i32, i32
  }
  func.func @transform_6(%arg0: i32) -> (i32, i32) {
    %c0_i32 = arith.constant 0 : i32
    %c0_i32_0 = arith.constant 0 : i32
    %c0_i32_1 = arith.constant 0 : i32
    return %c0_i32, %c0_i32_0 : i32, i32
  }
  func.func @transform_7(%arg0: i32) -> (i32, i32) {
    %c0_i32 = arith.constant 0 : i32
    %c0_i32_0 = arith.constant 0 : i32
    %c0_i32_1 = arith.constant 0 : i32
    return %c0_i32, %c0_i32_0 : i32, i32
  }
  func.func @transform_8(%arg0: i32) -> (i32, i32) {
    %c0_i32 = arith.constant 0 : i32
    %c0_i32_0 = arith.constant 0 : i32
    %c0_i32_1 = arith.constant 0 : i32
    return %c0_i32, %c0_i32_0 : i32, i32
  }
  func.func @transform_9(%arg0: i32) -> (i32, i32) {
    %c0_i32 = arith.constant 0 : i32
    %c0_i32_0 = arith.constant 0 : i32
    %c0_i32_1 = arith.constant 0 : i32
    return %c0_i32, %c0_i32_0 : i32, i32
  }
  func.func @transform_10(%arg0: i32) -> (i32, i32, i32) {
    %c0_i32 = arith.constant 0 : i32
    %c0_i32_0 = arith.constant 0 : i32
    %c0_i32_1 = arith.constant 0 : i32
    %c0_i32_2 = arith.constant 0 : i32
    return %c0_i32, %c0_i32_0, %c0_i32_1 : i32, i32, i32
  }
  func.func @transform_11(%arg0: i32) -> (i32, i32, i32) {
    %c0_i32 = arith.constant 0 : i32
    %c0_i32_0 = arith.constant 0 : i32
    %c0_i32_1 = arith.constant 0 : i32
    return %arg0, %c0_i32, %c0_i32_0 : i32, i32, i32
  }
}

</mosaic_0001>

<llo_original>
// kernel: tpu_custom_call.1
$region0: #{tpu_custom_call.1}
  #allocation0 [shape = 'u32[]', space=smem, size = 0x4, offset = 0x4, fixed_abs, tag = 'smem constant byte address 0x4 - core index']
  #allocation1 [shape = 'u32[144,128]{1,0:T(1,128)}', space=vmem, size = 0x12000, scoped, tag = 'internal scratch']
  %s0 = inlined_call_operand.vmem [shape: bf16[2,36,64], index: 0, kind: input, shape index: {}]
  %s1 = inlined_call_operand.vmem [shape: bf16[64,36], index: 1, kind: input, shape index: {}]
  %s2 = inlined_call_operand.vmem [shape: f32[64,1], index: 2, kind: input, shape index: {}]
  %s3 = inlined_call_operand.vmem [shape: bf16[32,288], index: 3, kind: input, shape index: {}]
  %s4 = inlined_call_operand.vmem [shape: f32[32,1], index: 4, kind: input, shape index: {}]
  %s5 = inlined_call_operand.vmem [shape: f32[32,1], index: 5, kind: input, shape index: {}]
  %s6 = inlined_call_operand.vmem [shape: f32[32,1], index: 6, kind: input, shape index: {}]
  %s7 = inlined_call_operand.vmem [shape: f32[32,1], index: 7, kind: input, shape index: {}]
  %s8 = inlined_call_operand.vmem [shape: f32[32,1], index: 8, kind: input, shape index: {}]
  %s9 = inlined_call_operand.vmem [shape: f32[64,64], index: 9, kind: input, shape index: {}]
  %s10 = inlined_call_operand.vmem [shape: f32[9,1,64], index: 10, kind: input, shape index: {}]
  %s11 = inlined_call_operand.hbm [shape: f32[2,32,64], index: 11, kind: output, shape index: {}]
  %s12 = sld [smem:[#allocation0]]
  $region77: #{tpu_custom_call.1} parent=0
    _
  %s14 = ssub.s32 1, %s12
  %s15 = scalar_select 0, %s14, %s12
  $region1: #{tpu_custom_call.1} parent=0
    #allocation2 [shape = 'u8[32768]{0}', space=vmem, size = 0x8000, scoped, tag = 'output window, operand 0']
    #allocation3 [shape = 's32[2]{0}', space=sflag, size = 0x8, scoped, tag = 'scoped memory for tpu_custom_call.1']
    %16 = vsyncpa [#allocation3], 0
    %s17 = scalar_lea.sflag [#allocation3], 1
    %18 = vsyncpa %s17, 0
    loop: start=0, step=1, limit=4
    $region2: #{tpu_custom_call.1} parent=1 // loop_pre_header
      _
    $region3: #{tpu_custom_call.1} parent=1 // loop_header
      %s20 = sphi 0, %s24
      %p21 = scmp.ge.s32.totalorder %s20, 4
      %s30 = sphi 0, %s32
      %s33 = sphi 0, %s30
      %s34 = sphi 0, %s33
      %s50 = sphi 0, %s34
      %s54 = sphi 0, %s54
      %s56 = sphi 0, %s54
      %s57 = sphi 0, %s56
      %s71 = sphi 0, %s57
      %s75 = sphi 0, %s75
      %s77 = sphi 0, %s75
      %s78 = sphi 0, %s77
      %s92 = sphi 0, %s78
      %s96 = sphi 0, %s96
      %s98 = sphi 0, %s96
      %s99 = sphi 0, %s98
      %s113 = sphi 0, %s99
      %s117 = sphi 0, %s117
      %s119 = sphi 0, %s117
      %s120 = sphi 0, %s119
      %s134 = sphi 0, %s120
      %s138 = sphi 0, %s138
      %s140 = sphi 0, %s138
      %s141 = sphi 0, %s140
      %s155 = sphi 0, %s141
      %s159 = sphi 0, %s159
      %s161 = sphi 0, %s159
      %s162 = sphi 0, %s161
      %s176 = sphi 0, %s162
      %s180 = sphi 0, %s180
      %s182 = sphi 0, %s180
      %s183 = sphi 0, %s182
      %s197 = sphi 0, %s183
      %s201 = sphi 0, %s201
      %s203 = sphi 0, %s201
      %s204 = sphi 0, %s203
      %s218 = sphi 0, %s204
      %s222 = sphi 0, %s222
      %s224 = sphi 0, %s222
      %s225 = sphi 0, %s224
      %s239 = sphi 0, %s225
      %s243 = sphi 0, %s243
      %s245 = sphi 0, %s243
      %s246 = sphi 0, %s245
      %s260 = sphi 0, %s246
      %s266 = sphi 0, %s268
      %s269 = sphi 0, %s266
      %s270 = sphi 0, %s269
      %s286 = sphi 0, %s270
    $region4: #{tpu_custom_call.1} parent=1 // loop_header_branch
      %23 = sbr.rel (%p21) target = $region8
    $region5: #{tpu_custom_call.1} parent=1 // loop_body
      %s25 = ssub.s32 %s20, 1
      %s26 = ssub.s32 %s20, 2
      %s27 = sadd.s32 %s20, 1
      %s28 = ssub.s32 %s20, %s27
      %p29 = scmp.eq.s32.totalorder %s28, 0
      %s31 = sadd.s32 %s30, 1
      %s32 = scalar_select %p29, %s30, %s31
      %p35 = pneg %p29
      %p36 = scmp.eq.s32.totalorder %s20, 1
      %p37 = por %p35, %p36
      %p38 = scmp.ne.s32.totalorder %s30, %s33
      %p39 = scmp.eq.s32.totalorder %s20, 0
      %p40 = por %p38, %p39
      %p41 = scmp.ne.s32.totalorder %s30, %s33
      %p42 = scmp.eq.s32.totalorder %s25, 1
      %p43 = por %p41, %p42
      %p44 = scmp.ne.s32.totalorder %s33, %s34
      %p45 = scmp.eq.s32.totalorder %s25, 0
      %p46 = por %p44, %p45
      %p47 = scmp.ne.s32.totalorder %s33, %s34
      %p48 = scmp.eq.s32.totalorder %s26, 1
      %p49 = por %p47, %p48
      %p51 = scmp.ne.s32.totalorder %s34, %s50
      %p52 = scmp.eq.s32.totalorder %s26, 0
      %p53 = por %p51, %p52
      %s55 = sadd.s32 %s54, 1
      %p58 = scmp.eq.s32.totalorder %s20, 1
      %p59 = scmp.ne.s32.totalorder %s54, %s56
      %p60 = scmp.eq.s32.totalorder %s20, 0
      %p61 = por %p59, %p60
      %p62 = scmp.ne.s32.totalorder %s54, %s56
      %p63 = scmp.eq.s32.totalorder %s25, 1
      %p64 = por %p62, %p63
      %p65 = scmp.ne.s32.totalorder %s56, %s57
      %p66 = scmp.eq.s32.totalorder %s25, 0
      %p67 = por %p65, %p66
      %p68 = scmp.ne.s32.totalorder %s56, %s57
      %p69 = scmp.eq.s32.totalorder %s26, 1
      %p70 = por %p68, %p69
      %p72 = scmp.ne.s32.totalorder %s57, %s71
      %p73 = scmp.eq.s32.totalorder %s26, 0
      %p74 = por %p72, %p73
      %s76 = sadd.s32 %s75, 1
      %p79 = scmp.eq.s32.totalorder %s20, 1
      %p80 = scmp.ne.s32.totalorder %s75, %s77
      %p81 = scmp.eq.s32.totalorder %s20, 0
      %p82 = por %p80, %p81
      %p83 = scmp.ne.s32.totalorder %s75, %s77
      %p84 = scmp.eq.s32.totalorder %s25, 1
      %p85 = por %p83, %p84
      %p86 = scmp.ne.s32.totalorder %s77, %s78
      %p87 = scmp.eq.s32.totalorder %s25, 0
      %p88 = por %p86, %p87
      %p89 = scmp.ne.s32.totalorder %s77, %s78
      %p90 = scmp.eq.s32.totalorder %s26, 1
      %p91 = por %p89, %p90
      %p93 = scmp.ne.s32.totalorder %s78, %s92
      %p94 = scmp.eq.s32.totalorder %s26, 0
      %p95 = por %p93, %p94
      %s97 = sadd.s32 %s96, 1
      %p100 = scmp.eq.s32.totalorder %s20, 1
      %p101 = scmp.ne.s32.totalorder %s96, %s98
      %p102 = scmp.eq.s32.totalorder %s20, 0
      %p103 = por %p101, %p102
      %p104 = scmp.ne.s32.totalorder %s96, %s98
      %p105 = scmp.eq.s32.totalorder %s25, 1
      %p106 = por %p104, %p105
      %p107 = scmp.ne.s32.totalorder %s98, %s99
      %p108 = scmp.eq.s32.totalorder %s25, 0
      %p109 = por %p107, %p108
      %p110 = scmp.ne.s32.totalorder %s98, %s99
      %p111 = scmp.eq.s32.totalorder %s26, 1
      %p112 = por %p110, %p111
      %p114 = scmp.ne.s32.totalorder %s99, %s113
      %p115 = scmp.eq.s32.totalorder %s26, 0
      %p116 = por %p114, %p115
      %s118 = sadd.s32 %s117, 1
      %p121 = scmp.eq.s32.totalorder %s20, 1
      %p122 = scmp.ne.s32.totalorder %s117, %s119
      %p123 = scmp.eq.s32.totalorder %s20, 0
      %p124 = por %p122, %p123
      %p125 = scmp.ne.s32.totalorder %s117, %s119
      %p126 = scmp.eq.s32.totalorder %s25, 1
      %p127 = por %p125, %p126
      %p128 = scmp.ne.s32.totalorder %s119, %s120
      %p129 = scmp.eq.s32.totalorder %s25, 0
      %p130 = por %p128, %p129
      %p131 = scmp.ne.s32.totalorder %s119, %s120
      %p132 = scmp.eq.s32.totalorder %s26, 1
      %p133 = por %p131, %p132
      %p135 = scmp.ne.s32.totalorder %s120, %s134
      %p136 = scmp.eq.s32.totalorder %s26, 0
      %p137 = por %p135, %p136
      %s139 = sadd.s32 %s138, 1
      %p142 = scmp.eq.s32.totalorder %s20, 1
      %p143 = scmp.ne.s32.totalorder %s138, %s140
      %p144 = scmp.eq.s32.totalorder %s20, 0
      %p145 = por %p143, %p144
      %p146 = scmp.ne.s32.totalorder %s138, %s140
      %p147 = scmp.eq.s32.totalorder %s25, 1
      %p148 = por %p146, %p147
      %p149 = scmp.ne.s32.totalorder %s140, %s141
      %p150 = scmp.eq.s32.totalorder %s25, 0
      %p151 = por %p149, %p150
      %p152 = scmp.ne.s32.totalorder %s140, %s141
      %p153 = scmp.eq.s32.totalorder %s26, 1
      %p154 = por %p152, %p153
      %p156 = scmp.ne.s32.totalorder %s141, %s155
      %p157 = scmp.eq.s32.totalorder %s26, 0
      %p158 = por %p156, %p157
      %s160 = sadd.s32 %s159, 1
      %p163 = scmp.eq.s32.totalorder %s20, 1
      %p164 = scmp.ne.s32.totalorder %s159, %s161
      %p165 = scmp.eq.s32.totalorder %s20, 0
      %p166 = por %p164, %p165
      %p167 = scmp.ne.s32.totalorder %s159, %s161
      %p168 = scmp.eq.s32.totalorder %s25, 1
      %p169 = por %p167, %p168
      %p170 = scmp.ne.s32.totalorder %s161, %s162
      %p171 = scmp.eq.s32.totalorder %s25, 0
      %p172 = por %p170, %p171
      %p173 = scmp.ne.s32.totalorder %s161, %s162
      %p174 = scmp.eq.s32.totalorder %s26, 1
      %p175 = por %p173, %p174
      %p177 = scmp.ne.s32.totalorder %s162, %s176
      %p178 = scmp.eq.s32.totalorder %s26, 0
      %p179 = por %p177, %p178
      %s181 = sadd.s32 %s180, 1
      %p184 = scmp.eq.s32.totalorder %s20, 1
      %p185 = scmp.ne.s32.totalorder %s180, %s182
      %p186 = scmp.eq.s32.totalorder %s20, 0
      %p187 = por %p185, %p186
      %p188 = scmp.ne.s32.totalorder %s180, %s182
      %p189 = scmp.eq.s32.totalorder %s25, 1
      %p190 = por %p188, %p189
      %p191 = scmp.ne.s32.totalorder %s182, %s183
      %p192 = scmp.eq.s32.totalorder %s25, 0
      %p193 = por %p191, %p192
      %p194 = scmp.ne.s32.totalorder %s182, %s183
      %p195 = scmp.eq.s32.totalorder %s26, 1
      %p196 = por %p194, %p195
      %p198 = scmp.ne.s32.totalorder %s183, %s197
      %p199 = scmp.eq.s32.totalorder %s26, 0
      %p200 = por %p198, %p199
      %s202 = sadd.s32 %s201, 1
      %p205 = scmp.eq.s32.totalorder %s20, 1
      %p206 = scmp.ne.s32.totalorder %s201, %s203
      %p207 = scmp.eq.s32.totalorder %s20, 0
      %p208 = por %p206, %p207
      %p209 = scmp.ne.s32.totalorder %s201, %s203
      %p210 = scmp.eq.s32.totalorder %s25, 1
      %p211 = por %p209, %p210
      %p212 = scmp.ne.s32.totalorder %s203, %s204
      %p213 = scmp.eq.s32.totalorder %s25, 0
      %p214 = por %p212, %p213
      %p215 = scmp.ne.s32.totalorder %s203, %s204
      %p216 = scmp.eq.s32.totalorder %s26, 1
      %p217 = por %p215, %p216
      %p219 = scmp.ne.s32.totalorder %s204, %s218
      %p220 = scmp.eq.s32.totalorder %s26, 0
      %p221 = por %p219, %p220
      %s223 = sadd.s32 %s222, 1
      %p226 = scmp.eq.s32.totalorder %s20, 1
      %p227 = scmp.ne.s32.totalorder %s222, %s224
      %p228 = scmp.eq.s32.totalorder %s20, 0
      %p229 = por %p227, %p228
      %p230 = scmp.ne.s32.totalorder %s222, %s224
      %p231 = scmp.eq.s32.totalorder %s25, 1
      %p232 = por %p230, %p231
      %p233 = scmp.ne.s32.totalorder %s224, %s225
      %p234 = scmp.eq.s32.totalorder %s25, 0
      %p235 = por %p233, %p234
      %p236 = scmp.ne.s32.totalorder %s224, %s225
      %p237 = scmp.eq.s32.totalorder %s26, 1
      %p238 = por %p236, %p237
      %p240 = scmp.ne.s32.totalorder %s225, %s239
      %p241 = scmp.eq.s32.totalorder %s26, 0
      %p242 = por %p240, %p241
      %s244 = sadd.s32 %s243, 1
      %p247 = scmp.eq.s32.totalorder %s20, 1
      %p248 = scmp.ne.s32.totalorder %s243, %s245
      %p249 = scmp.eq.s32.totalorder %s20, 0
      %p250 = por %p248, %p249
      %p251 = scmp.ne.s32.totalorder %s243, %s245
      %p252 = scmp.eq.s32.totalorder %s25, 1
      %p253 = por %p251, %p252
      %p254 = scmp.ne.s32.totalorder %s245, %s246
      %p255 = scmp.eq.s32.totalorder %s25, 0
      %p256 = por %p254, %p255
      %p257 = scmp.ne.s32.totalorder %s245, %s246
      %p258 = scmp.eq.s32.totalorder %s26, 1
      %p259 = por %p257, %p258
      %p261 = scmp.ne.s32.totalorder %s246, %s260
      %p262 = scmp.eq.s32.totalorder %s26, 0
      %p263 = por %p261, %p262
      %s264 = ssub.s32 %s20, %s27
      %p265 = scmp.eq.s32.totalorder %s264, 0
      %s267 = sadd.s32 %s266, 1
      %s268 = scalar_select %p265, %s266, %s267
      %p271 = pneg %p265
      %p272 = scmp.eq.s32.totalorder %s20, 1
      %p273 = por %p271, %p272
      %p274 = scmp.ne.s32.totalorder %s266, %s269
      %p275 = scmp.eq.s32.totalorder %s20, 0
      %p276 = por %p274, %p275
      %p277 = scmp.ne.s32.totalorder %s266, %s269
      %p278 = scmp.eq.s32.totalorder %s25, 1
      %p279 = por %p277, %p278
      %p280 = scmp.ne.s32.totalorder %s269, %s270
      %p281 = scmp.eq.s32.totalorder %s25, 0
      %p282 = por %p280, %p281
      %p283 = scmp.ne.s32.totalorder %s269, %s270
      %p284 = scmp.eq.s32.totalorder %s26, 1
      %p285 = por %p283, %p284
      %p287 = scmp.ne.s32.totalorder %s270, %s286
      %p288 = scmp.eq.s32.totalorder %s26, 0
      %p289 = por %p287, %p288
      %p290 = scmp.le.s32.totalorder 1, %s20
      %p291 = scmp.lt.s32.totalorder %s20, 3
      %p292 = pnand %p290, %p291
      %p293 = pneg %p292
      // Predicated region
      $region9: #{tpu_custom_call.1} parent=5 // pred_check
        _
      $region10: #{tpu_custom_call.1} parent=5 // pred_check_branch
        %295 = sbr.rel (%p292) target = $region12
      $region11: #{tpu_custom_call.1} parent=5 // pred_region
        %s296 = ssub.s32 %s20, 1
        // Predicated region
        $region13: #{tpu_custom_call.1} parent=11 // pred_check
          %p297 = pneg %p67
        $region14: #{tpu_custom_call.1} parent=11 // pred_check_branch
          %299 = sbr.rel (%p297) target = $region16
        $region15: #{tpu_custom_call.1} parent=11 // pred_region
          _
        $region16: #{tpu_custom_call.1} parent=11 // pred_fallthru
          _
        // Predicated region
        $region17: #{tpu_custom_call.1} parent=11 // pred_check
          %p300 = pneg %p88
        $region18: #{tpu_custom_call.1} parent=11 // pred_check_branch
          %302 = sbr.rel (%p300) target = $region20
        $region19: #{tpu_custom_call.1} parent=11 // pred_region
          _
        $region20: #{tpu_custom_call.1} parent=11 // pred_fallthru
          _
        // Predicated region
        $region21: #{tpu_custom_call.1} parent=11 // pred_check
          %p303 = pneg %p109
        $region22: #{tpu_custom_call.1} parent=11 // pred_check_branch
          %305 = sbr.rel (%p303) target = $region24
        $region23: #{tpu_custom_call.1} parent=11 // pred_region
          _
        $region24: #{tpu_custom_call.1} parent=11 // pred_fallthru
          _
        // Predicated region
        $region25: #{tpu_custom_call.1} parent=11 // pred_check
          %p306 = pneg %p130
        $region26: #{tpu_custom_call.1} parent=11 // pred_check_branch
          %308 = sbr.rel (%p306) target = $region28
        $region27: #{tpu_custom_call.1} parent=11 // pred_region
          _
        $region28: #{tpu_custom_call.1} parent=11 // pred_fallthru
          _
        // Predicated region
        $region29: #{tpu_custom_call.1} parent=11 // pred_check
          %p309 = pneg %p151
        $region30: #{tpu_custom_call.1} parent=11 // pred_check_branch
          %311 = sbr.rel (%p309) target = $region32
        $region31: #{tpu_custom_call.1} parent=11 // pred_region
          _
        $region32: #{tpu_custom_call.1} parent=11 // pred_fallthru
          _
        // Predicated region
        $region33: #{tpu_custom_call.1} parent=11 // pred_check
          %p312 = pneg %p172
        $region34: #{tpu_custom_call.1} parent=11 // pred_check_branch
          %314 = sbr.rel (%p312) target = $region36
        $region35: #{tpu_custom_call.1} parent=11 // pred_region
          _
        $region36: #{tpu_custom_call.1} parent=11 // pred_fallthru
          _
        // Predicated region
        $region37: #{tpu_custom_call.1} parent=11 // pred_check
          %p315 = pneg %p193
        $region38: #{tpu_custom_call.1} parent=11 // pred_check_branch
          %317 = sbr.rel (%p315) target = $region40
        $region39: #{tpu_custom_call.1} parent=11 // pred_region
          _
        $region40: #{tpu_custom_call.1} parent=11 // pred_fallthru
          _
        // Predicated region
        $region41: #{tpu_custom_call.1} parent=11 // pred_check
          %p318 = pneg %p214
        $region42: #{tpu_custom_call.1} parent=11 // pred_check_branch
          %320 = sbr.rel (%p318) target = $region44
        $region43: #{tpu_custom_call.1} parent=11 // pred_region
          _
        $region44: #{tpu_custom_call.1} parent=11 // pred_fallthru
          _
        // Predicated region
        $region45: #{tpu_custom_call.1} parent=11 // pred_check
          %p321 = pneg %p235
        $region46: #{tpu_custom_call.1} parent=11 // pred_check_branch
          %323 = sbr.rel (%p321) target = $region48
        $region47: #{tpu_custom_call.1} parent=11 // pred_region
          _
        $region48: #{tpu_custom_call.1} parent=11 // pred_fallthru
          _
        // Predicated region
        $region49: #{tpu_custom_call.1} parent=11 // pred_check
          %p324 = pneg %p256
        $region50: #{tpu_custom_call.1} parent=11 // pred_check_branch
          %326 = sbr.rel (%p324) target = $region52
        $region51: #{tpu_custom_call.1} parent=11 // pred_region
          _
        $region52: #{tpu_custom_call.1} parent=11 // pred_fallthru
          _
      $region12: #{tpu_custom_call.1} parent=5 // pred_fallthru
        _
      %p327 = scmp.lt.s32.totalorder %s20, 2
      // Predicated region
      $region53: #{tpu_custom_call.1} parent=5 // pred_check
        %p328 = pneg %p327
      $region54: #{tpu_custom_call.1} parent=5 // pred_check_branch
        %330 = sbr.rel (%p328) target = $region56
      $region55: #{tpu_custom_call.1} parent=5 // pred_region
        // Predicated region
        $region57: #{tpu_custom_call.1} parent=55 // pred_check
          %p331 = pneg %p40
        $region58: #{tpu_custom_call.1} parent=55 // pred_check_branch
          %333 = sbr.rel (%p331) target = $region60
        $region59: #{tpu_custom_call.1} parent=55 // pred_region
          %p334 = scmp.lt.s32.totalorder %s20, 1
          %s335 = scalar_select %p334, %s20, 1
          %s336 = smul.addr %s335, 5
          %s337 = smul.addr %s336, 4
          %s338 = scalar_lea.vmem %s0, %s337
        $region60: #{tpu_custom_call.1} parent=55 // pred_fallthru
          _
      $region56: #{tpu_custom_call.1} parent=5 // pred_fallthru
        _
      %p339 = scmp.le.s32.totalorder 1, %s20
      %p340 = scmp.lt.s32.totalorder %s20, 3
      %p341 = pnand %p339, %p340
      %p342 = pneg %p341
      // Predicated region
      $region61: #{tpu_custom_call.1} parent=5 // pred_check
        _
      $region62: #{tpu_custom_call.1} parent=5 // pred_check_branch
        %344 = sbr.rel (%p341) target = $region64
      $region63: #{tpu_custom_call.1} parent=5 // pred_region
        %s345 = ssub.s32 %s20, 1
        %p346 = scmp.lt.s32.totalorder %s25, 1
        %s347 = scalar_select %p346, %s25, 1
        %s348 = smul.addr %s347, 5
        %s349 = smul.addr %s348, 4
        %s350 = scalar_lea.vmem %s0, %s349
        %p351 = pneg %p46
        %p352 = pneg %p43
        %p353 = pneg %p67
        %p354 = pneg %p64
        %p355 = pneg %p88
        %p356 = pneg %p85
        %p357 = pneg %p109
        %p358 = pneg %p106
        %p359 = pneg %p130
        %p360 = pneg %p127
        %p361 = pneg %p151
        %p362 = pneg %p148
        %p363 = pneg %p172
        %p364 = pneg %p169
        %p365 = pneg %p193
        %p366 = pneg %p190
        %p367 = pneg %p214
        %p368 = pneg %p211
        %p369 = pneg %p235
        %p370 = pneg %p232
        %p371 = pneg %p256
        %p372 = pneg %p253
        %p373 = pneg %p282
        %p374 = pneg %p279
        %s375 = sand.u32 %s269, 1
        %s376 = scalar_lea.sflag [#allocation3], %s375
        %s377 = sand.u32 %s269, 1
        %s378 = smul.addr %s377, 32
        %s379 = scalar_lea.vmem [#allocation2], %s378
        %p380 = scmp.lt.s32.totalorder %s25, 1
        %s381 = scalar_select %p380, %s25, 1
        %s382 = smul.addr %s381, 5
        %s383 = smul.addr %s382, 4
        %s384 = scalar_lea.vmem %s0, %s383
        %v386 = vld [vmem:[%s9] sm:$0xff]
        %v387 = vld [vmem:[%s9 + $0x8] sm:$0xff]
        %v388 = vld [vmem:[%s9 + $0x10] sm:$0xff]
        %v389 = vld [vmem:[%s9 + $0x18] sm:$0xff]
        %v390 = vld [vmem:[%s9 + $0x20] sm:$0xff]
        %v391 = vld [vmem:[%s9 + $0x28] sm:$0xff]
        %v392 = vld [vmem:[%s9 + $0x30] sm:$0xff]
        %v393 = vld [vmem:[%s9 + $0x38] sm:$0xff]
        %v394 = vld [vmem:[%s1] sm:$0xf]
        %v395 = vld [vmem:[%s1 + $0x4] sm:$0xf]
        %v396 = vld [vmem:[%s1 + $0x8] sm:$0xf]
        %v397 = vld [vmem:[%s1 + $0xc] sm:$0xf]
        %v398 = vld [vmem:[%s1 + $0x10] sm:$0xf]
        %v399 = vld [vmem:[%s1 + $0x14] sm:$0xf]
        %v400 = vld [vmem:[%s1 + $0x18] sm:$0xf]
        %v401 = vld [vmem:[%s1 + $0x1c] sm:$0xf]
        %v402 = vld [vmem:[%s384] sm:$0xf]
        %v403 = vld [vmem:[%s384 + $0x4] sm:$0xf]
        %v404 = vld [vmem:[%s384 + $0x8] sm:$0xf]
        %v405 = vld [vmem:[%s384 + $0xc] sm:$0xf]
        %v406 = vld [vmem:[%s384 + $0x10] sm:$0x3]
        %v407 = vld [vmem:[%s2] sm:$0xff]
        %v408 = vld [vmem:[%s2 + $0x8] sm:$0xff]
        %v409 = vld [vmem:[%s2 + $0x10] sm:$0xff]
        %v410 = vld [vmem:[%s2 + $0x18] sm:$0xff]
        %v411 = vld [vmem:[%s2 + $0x20] sm:$0xff]
        %v412 = vld [vmem:[%s2 + $0x28] sm:$0xff]
        %v413 = vld [vmem:[%s2 + $0x30] sm:$0xff]
        %v414 = vld [vmem:[%s2 + $0x38] sm:$0xff]
        %416 = vset.pattern.permute.xlu0 0
        %417 = vperm.xlu0 %416, %v407
        %v418 = vpop.permute.xlu0 %417
        %421 = vset.pattern.permute.xlu0 0
        %422 = vperm.xlu0 %421, %v408
        %v423 = vpop.permute.xlu0 %422
        %426 = vset.pattern.permute.xlu0 0
        %427 = vperm.xlu0 %426, %v409
        %v428 = vpop.permute.xlu0 %427
        %431 = vset.pattern.permute.xlu0 0
        %432 = vperm.xlu0 %431, %v410
        %v433 = vpop.permute.xlu0 %432
        %436 = vset.pattern.permute.xlu0 0
        %437 = vperm.xlu0 %436, %v411
        %v438 = vpop.permute.xlu0 %437
        %441 = vset.pattern.permute.xlu0 0
        %442 = vperm.xlu0 %441, %v412
        %v443 = vpop.permute.xlu0 %442
        %446 = vset.pattern.permute.xlu0 0
        %447 = vperm.xlu0 %446, %v413
        %v448 = vpop.permute.xlu0 %447
        %451 = vset.pattern.permute.xlu0 0
        %452 = vperm.xlu0 %451, %v414
        %v453 = vpop.permute.xlu0 %452
        %v463 = vunpack.c.l.b16 %v394
        %v464 = vunpack.c.l.b16 %v395
        %v465 = vunpack.c.l.b16 %v396
        %v466 = vunpack.c.l.b16 %v397
        %v467 = vunpack.c.l.b16 %v398
        %v468 = vunpack.c.l.b16 %v399
        %v469 = vunpack.c.l.b16 %v400
        %v470 = vunpack.c.l.b16 %v401
        %v471 = vpack.c.b16 %v464, %v463
        %v472 = vpack.c.b16 %v466, %v465
        %v473 = vpack.c.b16 %v468, %v467
        %v474 = vpack.c.b16 %v470, %v469
        %v480 = vunpack.c.l.b16 %v402
        %v481 = vunpack.c.l.b16 %v403
        %v482 = vunpack.c.l.b16 %v404
        %v483 = vunpack.c.l.b16 %v405
        %v484 = vunpack.c.l.b16 %v406
        %v485 = vpack.c.b16 %v481, %v480
        %v486 = vpack.c.b16 %v483, %v482
        %v487 = vpack.c.b16 %v484, %v484
        %vm490 = vcmask 293888
        %v492 = vsel %vm490, %v471, 0
        %v495 = vsel %vm490, %v472, 0
        %v498 = vsel %vm490, %v473, 0
        %v501 = vsel %vm490, %v474, 0
        %vm503 = vcmask 1041408
        %v505 = vsel %vm503, %v487, 0
        %507 = vmatprep.subr.bf16.mxu0 0
        %508 = vmatpush1.bf16.msra.mxu0 0
        %509 = vmatprep.subr.bf16.mxu0 0
        %510 = vmatpush1.bf16.msra.mxu0 0
        %511 = vmatprep.subr.bf16.mxu0 0
        %512 = vmatpush1.bf16.msra.mxu0 0
        %513 = vmatprep.subr.bf16.mxu0 0
        %514 = vmatpush1.bf16.msra.mxu0 0
        %515 = vmatprep.subr.bf16.mxu0 0
        %516 = vmatpush1.bf16.msra.mxu0 0
        %517 = vmatprep.subr.bf16.mxu0 0
        %518 = vmatpush1.bf16.msra.mxu0 %v505
        %519 = vmatprep.subr.bf16.mxu0 0
        %520 = vmatpush1.bf16.msra.mxu0 %v486
        %521 = vmatprep.subr.bf16.mxu0 0
        %522 = vmatpush1.bf16.msra.mxu0 %v485
        %523 = vmatprep.subr.bf16.mxu0 0
        %524 = vmatpush2.bf16.msra.mxu0 0
        %525 = vmatprep.subr.bf16.mxu0 0
        %526 = vmatpush2.bf16.msra.mxu0 0
        %527 = vmatprep.subr.bf16.mxu0 0
        %528 = vmatpush2.bf16.msra.mxu0 0
        %529 = vmatprep.subr.bf16.mxu0 0
        %530 = vmatpush2.bf16.msra.mxu0 0
        %531 = vmatprep.subr.bf16.mxu0 0
        %532 = vmatpush2.bf16.msra.mxu0 0
        %533 = vmatprep.subr.bf16.mxu0 0
        %534 = vmatpush2.bf16.msra.mxu0 0
        %535 = vmatprep.subr.bf16.mxu0 0
        %536 = vmatpush2.bf16.msra.mxu0 0
        %537 = vmatprep.subr.bf16.mxu0 0
        %538 = vmatpush2.bf16.msra.mxu0 0
        %539 = vmatprep.mubr.bf16.mxu0 0
        %540 = vmatmul.mubr.bf16.gmra.mxu0 %v492
        %v541 = vpop.f32.mrf.mxu0
        %v542 = vadd.f32 %v418, %v541
        %v543 = vpop.f32.mrf.mxu0
        %v544 = vpop.f32.mrf.mxu0
        %v545 = vadd.f32 %v423, %v544
        %v546 = vpop.f32.mrf.mxu0
        %547 = vmatprep.mubr.bf16.mxu0 0
        %548 = vmatmul.mubr.bf16.gmra.mxu0 %v495
        %v549 = vpop.f32.mrf.mxu0
        %v550 = vadd.f32 %v428, %v549
        %v551 = vpop.f32.mrf.mxu0
        %v552 = vpop.f32.mrf.mxu0
        %v553 = vadd.f32 %v433, %v552
        %v554 = vpop.f32.mrf.mxu0
        %555 = vmatprep.mubr.bf16.mxu0 0
        %556 = vmatmul.mubr.bf16.gmra.mxu0 %v498
        %v557 = vpop.f32.mrf.mxu0
        %v558 = vadd.f32 %v438, %v557
        %v559 = vpop.f32.mrf.mxu0
        %v560 = vpop.f32.mrf.mxu0
        %v561 = vadd.f32 %v443, %v560
        %v562 = vpop.f32.mrf.mxu0
        %563 = vmatprep.mubr.bf16.mxu0 0
        %564 = vmatmul.mubr.bf16.gmra.mxu0 %v501
        %v565 = vpop.f32.mrf.mxu0
        %v566 = vadd.f32 %v448, %v565
        %v567 = vpop.f32.mrf.mxu0
        %v568 = vpop.f32.mrf.mxu0
        %v569 = vadd.f32 %v453, %v568
        %v570 = vpop.f32.mrf.mxu0
        %571 = vdwg.mxu0
        %v572 = vld [vmem:[%s5] sm:$0xff]
        %v573 = vld [vmem:[%s5 + $0x8] sm:$0xff]
        %v574 = vld [vmem:[%s5 + $0x10] sm:$0xff]
        %v575 = vld [vmem:[%s5 + $0x18] sm:$0xff]
        %v576 = vld [vmem:[%s6] sm:$0xff]
        %v577 = vld [vmem:[%s6 + $0x8] sm:$0xff]
        %v578 = vld [vmem:[%s6 + $0x10] sm:$0xff]
        %v579 = vld [vmem:[%s6 + $0x18] sm:$0xff]
        %v580 = vmul.f32 %v542, %v542
        %v581 = vmul.f32 %v545, %v545
        %v582 = vmul.f32 %v550, %v550
        %v583 = vmul.f32 %v553, %v553
        %vm584 = vcmask 523264
        %v586 = vsel %vm584, %v386, 0
        %v589 = vsel %vm584, %v387, 0
        %v592 = vsel %vm584, %v388, 0
        %v595 = vsel %vm584, %v389, 0
        %v598 = vsel %vm584, %v390, 0
        %v601 = vsel %vm584, %v391, 0
        %v604 = vsel %vm584, %v392, 0
        %v607 = vsel %vm584, %v393, 0
        %609 = vmatprep.subr.mxu0 0.0
        %610 = vmatpush1.msra.mxu0 0.0
        %611 = vmatprep.subr.mxu0 0.0
        %612 = vmatpush1.msra.mxu0 0.0
        %613 = vmatprep.subr.mxu0 0.0
        %614 = vmatpush1.msra.mxu0 0.0
        %615 = vmatprep.subr.mxu0 0.0
        %616 = vmatpush1.msra.mxu0 0.0
        %617 = vmatprep.subr.mxu0 0.0
        %618 = vmatpush1.msra.mxu0 0.0
        %619 = vmatprep.subr.mxu0 0.0
        %620 = vmatpush1.msra.mxu0 0.0
        %621 = vmatprep.subr.mxu0 0.0
        %622 = vmatpush1.msra.mxu0 0.0
        %623 = vmatprep.subr.mxu0 0.0
        %624 = vmatpush1.msra.mxu0 0.0
        %625 = vmatprep.subr.mxu0 0.0
        %626 = vmatpush1.msra.mxu0 %v583
        %627 = vmatprep.subr.mxu0 0.0
        %628 = vmatpush1.msra.mxu0 %v582
        %629 = vmatprep.subr.mxu0 0.0
        %630 = vmatpush1.msra.mxu0 %v581
        %631 = vmatprep.subr.mxu0 0.0
        %632 = vmatpush1.msra.mxu0 %v580
        %633 = vmatprep.subr.mxu0 0.0
        %634 = vmatpush1.msra.mxu0 %v553
        %635 = vmatprep.subr.mxu0 0.0
        %636 = vmatpush1.msra.mxu0 %v550
        %637 = vmatprep.subr.mxu0 0.0
        %638 = vmatpush1.msra.mxu0 %v545
        %639 = vmatprep.subr.mxu0 0.0
        %640 = vmatpush1.msra.mxu0 %v542
        %641 = vmatprep.subr.mxu0 0.0
        %642 = vmatpush2.msra.mxu0 0.0
        %643 = vmatprep.subr.mxu0 0.0
        %644 = vmatpush2.msra.mxu0 0.0
        %645 = vmatprep.subr.mxu0 0.0
        %646 = vmatpush2.msra.mxu0 0.0
        %647 = vmatprep.subr.mxu0 0.0
        %648 = vmatpush2.msra.mxu0 0.0
        %649 = vmatprep.subr.mxu0 0.0
        %650 = vmatpush2.msra.mxu0 0.0
        %651 = vmatprep.subr.mxu0 0.0
        %652 = vmatpush2.msra.mxu0 0.0
        %653 = vmatprep.subr.mxu0 0.0
        %654 = vmatpush2.msra.mxu0 0.0
        %655 = vmatprep.subr.mxu0 0.0
        %656 = vmatpush2.msra.mxu0 0.0
        %657 = vmatprep.subr.mxu0 0.0
        %658 = vmatpush2.msra.mxu0 0.0
        %659 = vmatprep.subr.mxu0 0.0
        %660 = vmatpush2.msra.mxu0 0.0
        %661 = vmatprep.subr.mxu0 0.0
        %662 = vmatpush2.msra.mxu0 0.0
        %663 = vmatprep.subr.mxu0 0.0
        %664 = vmatpush2.msra.mxu0 0.0
        %665 = vmatprep.subr.mxu0 0.0
        %666 = vmatpush2.msra.mxu0 0.0
        %667 = vmatprep.subr.mxu0 0.0
        %668 = vmatpush2.msra.mxu0 0.0
        %669 = vmatprep.subr.mxu0 0.0
        %670 = vmatpush2.msra.mxu0 0.0
        %671 = vmatprep.subr.mxu0 0.0
        %672 = vmatpush2.msra.mxu0 0.0
        %673 = vmatprep.mubr.f32.mxu0 0.0
        %674 = vmatmul.mubr.f32.gmra.mxu0 %v586
        %v675 = vpop.f32.mrf.mxu0
        %v676 = vadd.f32 0.0, %v675
        %v677 = vpop.f32.mrf.mxu0
        %678 = vmatprep.mubr.f32.mxu0 0.0
        %679 = vmatmul.mubr.f32.gmra.mxu0 %v589
        %v680 = vpop.f32.mrf.mxu0
        %v681 = vadd.f32 0.0, %v680
        %v682 = vpop.f32.mrf.mxu0
        %683 = vmatprep.mubr.f32.mxu0 0.0
        %684 = vmatmul.mubr.f32.gmra.mxu0 %v592
        %v685 = vpop.f32.mrf.mxu0
        %v686 = vadd.f32 0.0, %v685
        %v687 = vpop.f32.mrf.mxu0
        %688 = vmatprep.mubr.f32.mxu0 0.0
        %689 = vmatmul.mubr.f32.gmra.mxu0 %v595
        %v690 = vpop.f32.mrf.mxu0
        %v691 = vadd.f32 0.0, %v690
        %v692 = vpop.f32.mrf.mxu0
        %693 = vmatprep.mubr.f32.mxu0 0.0
        %694 = vmatmul.mubr.f32.gmra.mxu0 %v598
        %v695 = vpop.f32.mrf.mxu0
        %v696 = vadd.f32 0.0, %v695
        %v697 = vpop.f32.mrf.mxu0
        %698 = vmatprep.mubr.f32.mxu0 0.0
        %699 = vmatmul.mubr.f32.gmra.mxu0 %v601
        %v700 = vpop.f32.mrf.mxu0
        %v701 = vadd.f32 0.0, %v700
        %v702 = vpop.f32.mrf.mxu0
        %703 = vmatprep.mubr.f32.mxu0 0.0
        %704 = vmatmul.mubr.f32.gmra.mxu0 %v604
        %v705 = vpop.f32.mrf.mxu0
        %v706 = vadd.f32 0.0, %v705
        %v707 = vpop.f32.mrf.mxu0
        %708 = vmatprep.mubr.f32.mxu0 0.0
        %709 = vmatmul.mubr.f32.gmra.mxu0 %v607
        %v710 = vpop.f32.mrf.mxu0
        %v711 = vadd.f32 0.0, %v710
        %v712 = vpop.f32.mrf.mxu0
        %713 = vdwg.mxu0
        %v714 = vsel %vm584, %v676, 0.0
        %715 = vadd.xlane.f32.xlu0 %v714
        %v716 = vpop.xlane.xlu0 %715
        %v717 = vsel %vm584, %v681, 0.0
        %718 = vadd.xlane.f32.xlu0 %v717
        %v719 = vpop.xlane.xlu0 %718
        %v720 = vsel %vm584, %v686, 0.0
        %721 = vadd.xlane.f32.xlu0 %v720
        %v722 = vpop.xlane.xlu0 %721
        %v723 = vsel %vm584, %v691, 0.0
        %724 = vadd.xlane.f32.xlu0 %v723
        %v725 = vpop.xlane.xlu0 %724
        %v726 = vsel %vm584, %v696, 0.0
        %727 = vadd.xlane.f32.xlu0 %v726
        %v728 = vpop.xlane.xlu0 %727
        %v729 = vsel %vm584, %v701, 0.0
        %730 = vadd.xlane.f32.xlu0 %v729
        %v731 = vpop.xlane.xlu0 %730
        %v732 = vsel %vm584, %v706, 0.0
        %733 = vadd.xlane.f32.xlu0 %v732
        %v734 = vpop.xlane.xlu0 %733
        %v735 = vsel %vm584, %v711, 0.0
        %736 = vadd.xlane.f32.xlu0 %v735
        %v737 = vpop.xlane.xlu0 %736
        %v738 = vmul.f32 %v716, %v716
        %v739 = vmul.f32 %v719, %v719
        %v740 = vmul.f32 %v722, %v722
        %v741 = vmul.f32 %v725, %v725
        %v742 = vsub.f32 %v728, %v738
        %v743 = vsub.f32 %v731, %v739
        %v744 = vsub.f32 %v734, %v740
        %v745 = vsub.f32 %v737, %v741
        %v746 = vadd.f32 %v742, 1e-05
        %v747 = vadd.f32 %v743, 1e-05
        %v748 = vadd.f32 %v744, 1e-05
        %v749 = vadd.f32 %v745, 1e-05
        %v750 = vrsqrt.pop %v746
        %v751 = vrsqrt.pop %v747
        %v752 = vrsqrt.pop %v748
        %v753 = vrsqrt.pop %v749
        %v754 = vsub.f32 %v542, %v716
        %v755 = vsub.f32 %v545, %v719
        %v756 = vsub.f32 %v550, %v722
        %v757 = vsub.f32 %v553, %v725
        %v758 = vmul.f32 %v754, %v750
        %v759 = vmul.f32 %v755, %v751
        %v760 = vmul.f32 %v756, %v752
        %v761 = vmul.f32 %v757, %v753
        %763 = vset.pattern.permute.xlu0 0
        %764 = vperm.xlu0 %763, %v572
        %v765 = vpop.permute.xlu0 %764
        %768 = vset.pattern.permute.xlu0 0
        %769 = vperm.xlu0 %768, %v573
        %v770 = vpop.permute.xlu0 %769
        %773 = vset.pattern.permute.xlu0 0
        %774 = vperm.xlu0 %773, %v574
        %v775 = vpop.permute.xlu0 %774
        %778 = vset.pattern.permute.xlu0 0
        %779 = vperm.xlu0 %778, %v575
        %v780 = vpop.permute.xlu0 %779
        %v782 = vmul.f32 %v758, %v765
        %v783 = vmul.f32 %v759, %v770
        %v784 = vmul.f32 %v760, %v775
        %v785 = vmul.f32 %v761, %v780
        %787 = vset.pattern.permute.xlu0 0
        %788 = vperm.xlu0 %787, %v576
        %v789 = vpop.permute.xlu0 %788
        %792 = vset.pattern.permute.xlu0 0
        %793 = vperm.xlu0 %792, %v577
        %v794 = vpop.permute.xlu0 %793
        %797 = vset.pattern.permute.xlu0 0
        %798 = vperm.xlu0 %797, %v578
        %v799 = vpop.permute.xlu0 %798
        %802 = vset.pattern.permute.xlu0 0
        %803 = vperm.xlu0 %802, %v579
        %v804 = vpop.permute.xlu0 %803
        %v806 = vadd.f32 %v782, %v789
        %v807 = vadd.f32 %v783, %v794
        %v808 = vadd.f32 %v784, %v799
        %v809 = vadd.f32 %v785, %v804
        %v810 = vmax.f32 %v806, 0.0
        %v811 = vmax.f32 %v807, 0.0
        %v812 = vmax.f32 %v808, 0.0
        %v813 = vmax.f32 %v809, 0.0
        %818 = vrot.lane.b32.xlu0 %v810, 73
        %v819 = vpop.permute.xlu0 %818
        %820 = vrot.lane.b32.xlu0 %v811, 73
        %v821 = vpop.permute.xlu0 %820
        %822 = vrot.lane.b32.xlu0 %v812, 73
        %v823 = vpop.permute.xlu0 %822
        %824 = vrot.lane.b32.xlu0 %v813, 73
        %v825 = vpop.permute.xlu0 %824
        %830 = vrot.lane.b32.xlu0 %v810, 9
        %v831 = vpop.permute.xlu0 %830
        %832 = vrot.lane.b32.xlu0 %v811, 9
        %v833 = vpop.permute.xlu0 %832
        %834 = vrot.lane.b32.xlu0 %v812, 9
        %v835 = vpop.permute.xlu0 %834
        %836 = vrot.lane.b32.xlu0 %v813, 9
        %v837 = vpop.permute.xlu0 %836
        %vm842 = vcmask 72704
        %v843 = vsel %vm842, %v819, %v831
        %v844 = vsel %vm842, %v821, %v833
        %v845 = vsel %vm842, %v823, %v835
        %v846 = vsel %vm842, %v825, %v837
        %v847 = vld [vmem:[%s10] sm:$0x1]
        %v849 = vlaneseq
        %v850 = vshrl.u32 %v849, 7
        %v851 = vsub.s32 0, %v850
        %v852 = vrot.slane %v847, %v851
        %v854 = vmul.f32 %v843, %v852
        %v855 = vmul.f32 %v844, %v852
        %v856 = vmul.f32 %v845, %v852
        %v857 = vmul.f32 %v846, %v852
        %858 = vrot.lane.b32.xlu0 %v810, 72
        %v859 = vpop.permute.xlu0 %858
        %860 = vrot.lane.b32.xlu0 %v811, 72
        %v861 = vpop.permute.xlu0 %860
        %862 = vrot.lane.b32.xlu0 %v812, 72
        %v863 = vpop.permute.xlu0 %862
        %864 = vrot.lane.b32.xlu0 %v813, 72
        %v865 = vpop.permute.xlu0 %864
        %870 = vrot.lane.b32.xlu0 %v810, 8
        %v871 = vpop.permute.xlu0 %870
        %872 = vrot.lane.b32.xlu0 %v811, 8
        %v873 = vpop.permute.xlu0 %872
        %874 = vrot.lane.b32.xlu0 %v812, 8
        %v875 = vpop.permute.xlu0 %874
        %876 = vrot.lane.b32.xlu0 %v813, 8
        %v877 = vpop.permute.xlu0 %876
        %vm882 = vcmask 64512
        %v883 = vsel %vm882, %v859, %v871
        %v884 = vsel %vm882, %v861, %v873
        %v885 = vsel %vm882, %v863, %v875
        %v886 = vsel %vm882, %v865, %v877
        %s887 = scalar_lea.vmem %s10, 1
        %v888 = vld [vmem:[%s887] sm:$0x1]
        %v890 = vlaneseq
        %v891 = vshrl.u32 %v890, 7
        %v892 = vsub.s32 0, %v891
        %v893 = vrot.slane %v888, %v892
        %v895 = vmul.f32 %v883, %v893
        %v896 = vmul.f32 %v884, %v893
        %v897 = vmul.f32 %v885, %v893
        %v898 = vmul.f32 %v886, %v893
        %899 = vrot.lane.b32.xlu0 %v810, 71
        %v900 = vpop.permute.xlu0 %899
        %901 = vrot.lane.b32.xlu0 %v811, 71
        %v902 = vpop.permute.xlu0 %901
        %903 = vrot.lane.b32.xlu0 %v812, 71
        %v904 = vpop.permute.xlu0 %903
        %905 = vrot.lane.b32.xlu0 %v813, 71
        %v906 = vpop.permute.xlu0 %905
        %911 = vrot.lane.b32.xlu0 %v810, 7
        %v912 = vpop.permute.xlu0 %911
        %913 = vrot.lane.b32.xlu0 %v811, 7
        %v914 = vpop.permute.xlu0 %913
        %915 = vrot.lane.b32.xlu0 %v812, 7
        %v916 = vpop.permute.xlu0 %915
        %917 = vrot.lane.b32.xlu0 %v813, 7
        %v918 = vpop.permute.xlu0 %917
        %vm923 = vcmask 56320
        %v924 = vsel %vm923, %v900, %v912
        %v925 = vsel %vm923, %v902, %v914
        %v926 = vsel %vm923, %v904, %v916
        %v927 = vsel %vm923, %v906, %v918
        %s928 = scalar_lea.vmem %s10, 2
        %v929 = vld [vmem:[%s928] sm:$0x1]
        %v931 = vlaneseq
        %v932 = vshrl.u32 %v931, 7
        %v933 = vsub.s32 0, %v932
        %v934 = vrot.slane %v929, %v933
        %v936 = vmul.f32 %v924, %v934
        %v937 = vmul.f32 %v925, %v934
        %v938 = vmul.f32 %v926, %v934
        %v939 = vmul.f32 %v927, %v934
        %940 = vrot.lane.b32.xlu0 %v810, 65
        %v941 = vpop.permute.xlu0 %940
        %942 = vrot.lane.b32.xlu0 %v811, 65
        %v943 = vpop.permute.xlu0 %942
        %944 = vrot.lane.b32.xlu0 %v812, 65
        %v945 = vpop.permute.xlu0 %944
        %946 = vrot.lane.b32.xlu0 %v813, 65
        %v947 = vpop.permute.xlu0 %946
        %952 = vrot.lane.b32.xlu0 %v810, 1
        %v953 = vpop.permute.xlu0 %952
        %954 = vrot.lane.b32.xlu0 %v811, 1
        %v955 = vpop.permute.xlu0 %954
        %956 = vrot.lane.b32.xlu0 %v812, 1
        %v957 = vpop.permute.xlu0 %956
        %958 = vrot.lane.b32.xlu0 %v813, 1
        %v959 = vpop.permute.xlu0 %958
        %vm964 = vcmask 7168
        %v965 = vsel %vm964, %v941, %v953
        %v966 = vsel %vm964, %v943, %v955
        %v967 = vsel %vm964, %v945, %v957
        %v968 = vsel %vm964, %v947, %v959
        %s969 = scalar_lea.vmem %s10, 3
        %v970 = vld [vmem:[%s969] sm:$0x1]
        %v972 = vlaneseq
        %v973 = vshrl.u32 %v972, 7
        %v974 = vsub.s32 0, %v973
        %v975 = vrot.slane %v970, %v974
        %v977 = vmul.f32 %v965, %v975
        %v978 = vmul.f32 %v966, %v975
        %v979 = vmul.f32 %v967, %v975
        %v980 = vmul.f32 %v968, %v975
        %s981 = scalar_lea.vmem %s10, 4
        %v982 = vld [vmem:[%s981] sm:$0x1]
        %v984 = vlaneseq
        %v985 = vshrl.u32 %v984, 7
        %v986 = vsub.s32 0, %v985
        %v987 = vrot.slane %v982, %v986
        %v989 = vmul.f32 %v810, %v987
        %v990 = vmul.f32 %v811, %v987
        %v991 = vmul.f32 %v812, %v987
        %v992 = vmul.f32 %v813, %v987
        %993 = vrot.lane.b32.xlu0 %v810, 127
        %v994 = vpop.permute.xlu0 %993
        %995 = vrot.lane.b32.xlu0 %v811, 127
        %v996 = vpop.permute.xlu0 %995
        %997 = vrot.lane.b32.xlu0 %v812, 127
        %v998 = vpop.permute.xlu0 %997
        %999 = vrot.lane.b32.xlu0 %v813, 127
        %v1000 = vpop.permute.xlu0 %999
        %1005 = vrot.lane.b32.xlu0 %v810, 63
        %v1006 = vpop.permute.xlu0 %1005
        %1007 = vrot.lane.b32.xlu0 %v811, 63
        %v1008 = vpop.permute.xlu0 %1007
        %1009 = vrot.lane.b32.xlu0 %v812, 63
        %v1010 = vpop.permute.xlu0 %1009
        %1011 = vrot.lane.b32.xlu0 %v813, 63
        %v1012 = vpop.permute.xlu0 %1011
        %vm1017 = vcmask 515072
        %v1018 = vsel %vm1017, %v994, %v1006
        %v1019 = vsel %vm1017, %v996, %v1008
        %v1020 = vsel %vm1017, %v998, %v1010
        %v1021 = vsel %vm1017, %v1000, %v1012
        %s1022 = scalar_lea.vmem %s10, 5
        %v1023 = vld [vmem:[%s1022] sm:$0x1]
        %v1025 = vlaneseq
        %v1026 = vshrl.u32 %v1025, 7
        %v1027 = vsub.s32 0, %v1026
        %v1028 = vrot.slane %v1023, %v1027
        %v1030 = vmul.f32 %v1018, %v1028
        %v1031 = vmul.f32 %v1019, %v1028
        %v1032 = vmul.f32 %v1020, %v1028
        %v1033 = vmul.f32 %v1021, %v1028
        %1034 = vrot.lane.b32.xlu0 %v810, 121
        %v1035 = vpop.permute.xlu0 %1034
        %1036 = vrot.lane.b32.xlu0 %v811, 121
        %v1037 = vpop.permute.xlu0 %1036
        %1038 = vrot.lane.b32.xlu0 %v812, 121
        %v1039 = vpop.permute.xlu0 %1038
        %1040 = vrot.lane.b32.xlu0 %v813, 121
        %v1041 = vpop.permute.xlu0 %1040
        %1046 = vrot.lane.b32.xlu0 %v810, 57
        %v1047 = vpop.permute.xlu0 %1046
        %1048 = vrot.lane.b32.xlu0 %v811, 57
        %v1049 = vpop.permute.xlu0 %1048
        %1050 = vrot.lane.b32.xlu0 %v812, 57
        %v1051 = vpop.permute.xlu0 %1050
        %1052 = vrot.lane.b32.xlu0 %v813, 57
        %v1053 = vpop.permute.xlu0 %1052
        %vm1058 = vcmask 465920
        %v1059 = vsel %vm1058, %v1035, %v1047
        %v1060 = vsel %vm1058, %v1037, %v1049
        %v1061 = vsel %vm1058, %v1039, %v1051
        %v1062 = vsel %vm1058, %v1041, %v1053
        %s1063 = scalar_lea.vmem %s10, 6
        %v1064 = vld [vmem:[%s1063] sm:$0x1]
        %v1066 = vlaneseq
        %v1067 = vshrl.u32 %v1066, 7
        %v1068 = vsub.s32 0, %v1067
        %v1069 = vrot.slane %v1064, %v1068
        %v1071 = vmul.f32 %v1059, %v1069
        %v1072 = vmul.f32 %v1060, %v1069
        %v1073 = vmul.f32 %v1061, %v1069
        %v1074 = vmul.f32 %v1062, %v1069
        %1075 = vrot.lane.b32.xlu0 %v810, 120
        %v1076 = vpop.permute.xlu0 %1075
        %1077 = vrot.lane.b32.xlu0 %v811, 120
        %v1078 = vpop.permute.xlu0 %1077
        %1079 = vrot.lane.b32.xlu0 %v812, 120
        %v1080 = vpop.permute.xlu0 %1079
        %1081 = vrot.lane.b32.xlu0 %v813, 120
        %v1082 = vpop.permute.xlu0 %1081
        %1087 = vrot.lane.b32.xlu0 %v810, 56
        %v1088 = vpop.permute.xlu0 %1087
        %1089 = vrot.lane.b32.xlu0 %v811, 56
        %v1090 = vpop.permute.xlu0 %1089
        %1091 = vrot.lane.b32.xlu0 %v812, 56
        %v1092 = vpop.permute.xlu0 %1091
        %1093 = vrot.lane.b32.xlu0 %v813, 56
        %v1094 = vpop.permute.xlu0 %1093
        %vm1099 = vcmask 457728
        %v1100 = vsel %vm1099, %v1076, %v1088
        %v1101 = vsel %vm1099, %v1078, %v1090
        %v1102 = vsel %vm1099, %v1080, %v1092
        %v1103 = vsel %vm1099, %v1082, %v1094
        %s1104 = scalar_lea.vmem %s10, 7
        %v1105 = vld [vmem:[%s1104] sm:$0x1]
        %v1107 = vlaneseq
        %v1108 = vshrl.u32 %v1107, 7
        %v1109 = vsub.s32 0, %v1108
        %v1110 = vrot.slane %v1105, %v1109
        %v1112 = vmul.f32 %v1100, %v1110
        %v1113 = vmul.f32 %v1101, %v1110
        %v1114 = vmul.f32 %v1102, %v1110
        %v1115 = vmul.f32 %v1103, %v1110
        %1116 = vrot.lane.b32.xlu0 %v810, 119
        %v1117 = vpop.permute.xlu0 %1116
        %1118 = vrot.lane.b32.xlu0 %v811, 119
        %v1119 = vpop.permute.xlu0 %1118
        %1120 = vrot.lane.b32.xlu0 %v812, 119
        %v1121 = vpop.permute.xlu0 %1120
        %1122 = vrot.lane.b32.xlu0 %v813, 119
        %v1123 = vpop.permute.xlu0 %1122
        %1128 = vrot.lane.b32.xlu0 %v810, 55
        %v1129 = vpop.permute.xlu0 %1128
        %1130 = vrot.lane.b32.xlu0 %v811, 55
        %v1131 = vpop.permute.xlu0 %1130
        %1132 = vrot.lane.b32.xlu0 %v812, 55
        %v1133 = vpop.permute.xlu0 %1132
        %1134 = vrot.lane.b32.xlu0 %v813, 55
        %v1135 = vpop.permute.xlu0 %1134
        %vm1140 = vcmask 449536
        %v1141 = vsel %vm1140, %v1117, %v1129
        %v1142 = vsel %vm1140, %v1119, %v1131
        %v1143 = vsel %vm1140, %v1121, %v1133
        %v1144 = vsel %vm1140, %v1123, %v1135
        %s1145 = scalar_lea.vmem %s10, 8
        %v1146 = vld [vmem:[%s1145] sm:$0x1]
        %v1148 = vlaneseq
        %v1149 = vshrl.u32 %v1148, 7
        %v1150 = vsub.s32 0, %v1149
        %v1151 = vrot.slane %v1146, %v1150
        %v1153 = vmul.f32 %v1141, %v1151
        %v1154 = vmul.f32 %v1142, %v1151
        %v1155 = vmul.f32 %v1143, %v1151
        %v1156 = vmul.f32 %v1144, %v1151
        %v1157 = vpack.c.bf16 %v855, %v854
        %v1158 = vpack.c.bf16 %v857, %v856
        %v1159 = vpack.c.bf16 %v896, %v895
        %v1160 = vpack.c.bf16 %v898, %v897
        %v1161 = vpack.c.bf16 %v937, %v936
        %v1162 = vpack.c.bf16 %v939, %v938
        %v1163 = vpack.c.bf16 %v978, %v977
        %v1164 = vpack.c.bf16 %v980, %v979
        %v1165 = vpack.c.bf16 %v990, %v989
        %v1166 = vpack.c.bf16 %v992, %v991
        %v1167 = vpack.c.bf16 %v1031, %v1030
        %v1168 = vpack.c.bf16 %v1033, %v1032
        %v1169 = vpack.c.bf16 %v1072, %v1071
        %v1170 = vpack.c.bf16 %v1074, %v1073
        %v1171 = vpack.c.bf16 %v1113, %v1112
        %v1172 = vpack.c.bf16 %v1115, %v1114
        %v1173 = vpack.c.bf16 %v1154, %v1153
        %v1174 = vpack.c.bf16 %v1156, %v1155
        %v1175 = vld [vmem:[%s3] sm:$0xff]
        %v1176 = vld [vmem:[%s3 + $0x8] sm:$0xf]
        %v1177 = vld [vmem:[%s3 + $0xc] sm:$0xff]
        %v1178 = vld [vmem:[%s3 + $0x14] sm:$0xf]
        %v1179 = vld [vmem:[%s3 + $0x18] sm:$0xff]
        %v1180 = vld [vmem:[%s3 + $0x20] sm:$0xf]
        %v1181 = vld [vmem:[%s3 + $0x24] sm:$0xff]
        %v1182 = vld [vmem:[%s3 + $0x2c] sm:$0xf]
        %v1183 = vld [vmem:[%s4] sm:$0xff]
        %v1184 = vld [vmem:[%s4 + $0x8] sm:$0xff]
        %v1185 = vld [vmem:[%s4 + $0x10] sm:$0xff]
        %v1186 = vld [vmem:[%s4 + $0x18] sm:$0xff]
        %1188 = vset.pattern.permute.xlu0 0
        %1189 = vperm.xlu0 %1188, %v1183
        %v1190 = vpop.permute.xlu0 %1189
        %1193 = vset.pattern.permute.xlu0 0
        %1194 = vperm.xlu0 %1193, %v1184
        %v1195 = vpop.permute.xlu0 %1194
        %1198 = vset.pattern.permute.xlu0 0
        %1199 = vperm.xlu0 %1198, %v1185
        %v1200 = vpop.permute.xlu0 %1199
        %1203 = vset.pattern.permute.xlu0 0
        %1204 = vperm.xlu0 %1203, %v1186
        %v1205 = vpop.permute.xlu0 %1204
        %v1215 = vunpack.c.l.b16 %v1175
        %v1216 = vunpack.c.h.b16 %v1175
        %v1217 = vunpack.c.l.b16 %v1176
        %v1218 = vunpack.c.l.b16 %v1177
        %v1219 = vunpack.c.h.b16 %v1177
        %v1220 = vunpack.c.l.b16 %v1178
        %v1221 = vunpack.c.l.b16 %v1179
        %v1222 = vunpack.c.h.b16 %v1179
        %v1223 = vunpack.c.l.b16 %v1180
        %v1224 = vunpack.c.l.b16 %v1181
        %v1225 = vunpack.c.h.b16 %v1181
        %v1226 = vunpack.c.l.b16 %v1182
        %v1227 = vpack.c.b16 %v1218, %v1215
        %v1228 = vpack.c.b16 %v1219, %v1216
        %v1229 = vpack.c.b16 %v1220, %v1217
        %v1230 = vpack.c.b16 %v1224, %v1221
        %v1231 = vpack.c.b16 %v1225, %v1222
        %v1232 = vpack.c.b16 %v1226, %v1223
        %vm1237 = vcmask 261120
        %v1239 = vsel %vm1237, %v1229, 0
        %v1242 = vsel %vm1237, %v1232, 0
        %1244 = vmatprep.subr.bf16.mxu0 0
        %1245 = vmatpush1.bf16.msra.mxu0 %v1164
        %1246 = vmatprep.subr.bf16.mxu0 0
        %1247 = vmatpush1.bf16.msra.mxu0 %v1163
        %1248 = vmatprep.subr.bf16.mxu0 0
        %1249 = vmatpush1.bf16.msra.mxu0 %v1162
        %1250 = vmatprep.subr.bf16.mxu0 0
        %1251 = vmatpush1.bf16.msra.mxu0 %v1161
        %1252 = vmatprep.subr.bf16.mxu0 0
        %1253 = vmatpush1.bf16.msra.mxu0 %v1160
        %1254 = vmatprep.subr.bf16.mxu0 0
        %1255 = vmatpush1.bf16.msra.mxu0 %v1159
        %1256 = vmatprep.subr.bf16.mxu0 0
        %1257 = vmatpush1.bf16.msra.mxu0 %v1158
        %1258 = vmatprep.subr.bf16.mxu0 0
        %1259 = vmatpush1.bf16.msra.mxu0 %v1157
        %1260 = vmatprep.subr.bf16.mxu0 0
        %1261 = vmatpush2.bf16.msra.mxu0 %v1172
        %1262 = vmatprep.subr.bf16.mxu0 0
        %1263 = vmatpush2.bf16.msra.mxu0 %v1171
        %1264 = vmatprep.subr.bf16.mxu0 0
        %1265 = vmatpush2.bf16.msra.mxu0 %v1170
        %1266 = vmatprep.subr.bf16.mxu0 0
        %1267 = vmatpush2.bf16.msra.mxu0 %v1169
        %1268 = vmatprep.subr.bf16.mxu0 0
        %1269 = vmatpush2.bf16.msra.mxu0 %v1168
        %1270 = vmatprep.subr.bf16.mxu0 0
        %1271 = vmatpush2.bf16.msra.mxu0 %v1167
        %1272 = vmatprep.subr.bf16.mxu0 0
        %1273 = vmatpush2.bf16.msra.mxu0 %v1166
        %1274 = vmatprep.subr.bf16.mxu0 0
        %1275 = vmatpush2.bf16.msra.mxu0 %v1165
        %1276 = vmatprep.mubr.bf16.mxu0 %v1228
        %1277 = vmatmul.mubr.bf16.gmra.mxu0 %v1227
        %v1278 = vpop.f32.mrf.mxu0
        %v1279 = vadd.f32 %v1190, %v1278
        %v1280 = vpop.f32.mrf.mxu0
        %v1281 = vpop.f32.mrf.mxu0
        %v1282 = vadd.f32 %v1195, %v1281
        %v1283 = vpop.f32.mrf.mxu0
        %1284 = vmatprep.mubr.bf16.mxu0 %v1231
        %1285 = vmatmul.mubr.bf16.gmra.mxu0 %v1230
        %v1286 = vpop.f32.mrf.mxu0
        %v1287 = vadd.f32 %v1200, %v1286
        %v1288 = vpop.f32.mrf.mxu0
        %v1289 = vpop.f32.mrf.mxu0
        %v1290 = vadd.f32 %v1205, %v1289
        %v1291 = vpop.f32.mrf.mxu0
        %1292 = vdwg.mxu0
        %1293 = vmatprep.subr.bf16.mxu0 0
        %1294 = vmatpush1.bf16.msra.mxu0 0
        %1295 = vmatprep.subr.bf16.mxu0 0
        %1296 = vmatpush1.bf16.msra.mxu0 0
        %1297 = vmatprep.subr.bf16.mxu0 0
        %1298 = vmatpush1.bf16.msra.mxu0 0
        %1299 = vmatprep.subr.bf16.mxu0 0
        %1300 = vmatpush1.bf16.msra.mxu0 0
        %1301 = vmatprep.subr.bf16.mxu0 0
        %1302 = vmatpush1.bf16.msra.mxu0 0
        %1303 = vmatprep.subr.bf16.mxu0 0
        %1304 = vmatpush1.bf16.msra.mxu0 0
        %1305 = vmatprep.subr.bf16.mxu0 0
        %1306 = vmatpush1.bf16.msra.mxu0 %v1174
        %1307 = vmatprep.subr.bf16.mxu0 0
        %1308 = vmatpush1.bf16.msra.mxu0 %v1173
        %1309 = vmatprep.subr.bf16.mxu0 0
        %1310 = vmatpush2.bf16.msra.mxu0 0
        %1311 = vmatprep.subr.bf16.mxu0 0
        %1312 = vmatpush2.bf16.msra.mxu0 0
        %1313 = vmatprep.subr.bf16.mxu0 0
        %1314 = vmatpush2.bf16.msra.mxu0 0
        %1315 = vmatprep.subr.bf16.mxu0 0
        %1316 = vmatpush2.bf16.msra.mxu0 0
        %1317 = vmatprep.subr.bf16.mxu0 0
        %1318 = vmatpush2.bf16.msra.mxu0 0
        %1319 = vmatprep.subr.bf16.mxu0 0
        %1320 = vmatpush2.bf16.msra.mxu0 0
        %1321 = vmatprep.subr.bf16.mxu0 0
        %1322 = vmatpush2.bf16.msra.mxu0 0
        %1323 = vmatprep.subr.bf16.mxu0 0
        %1324 = vmatpush2.bf16.msra.mxu0 0
        %1325 = vmatprep.mubr.bf16.mxu0 0
        %1326 = vmatmul.mubr.bf16.gmra.mxu0 %v1239
        %v1327 = vpop.f32.mrf.mxu0
        %v1328 = vadd.f32 %v1279, %v1327
        %v1329 = vpop.f32.mrf.mxu0
        %v1330 = vpop.f32.mrf.mxu0
        %v1331 = vadd.f32 %v1282, %v1330
        %v1332 = vpop.f32.mrf.mxu0
        %1333 = vmatprep.mubr.bf16.mxu0 0
        %1334 = vmatmul.mubr.bf16.gmra.mxu0 %v1242
        %v1335 = vpop.f32.mrf.mxu0
        %v1336 = vadd.f32 %v1287, %v1335
        %v1337 = vpop.f32.mrf.mxu0
        %v1338 = vpop.f32.mrf.mxu0
        %v1339 = vadd.f32 %v1290, %v1338
        %v1340 = vpop.f32.mrf.mxu0
        %1341 = vdwg.mxu0
        %v1342 = vadd.f32 %v1328, %v558
        %v1343 = vadd.f32 %v1331, %v561
        %v1344 = vadd.f32 %v1336, %v566
        %v1345 = vadd.f32 %v1339, %v569
        %v1346 = vld [vmem:[%s7] sm:$0xff]
        %v1347 = vld [vmem:[%s7 + $0x8] sm:$0xff]
        %v1348 = vld [vmem:[%s7 + $0x10] sm:$0xff]
        %v1349 = vld [vmem:[%s7 + $0x18] sm:$0xff]
        %v1350 = vld [vmem:[%s8] sm:$0xff]
        %v1351 = vld [vmem:[%s8 + $0x8] sm:$0xff]
        %v1352 = vld [vmem:[%s8 + $0x10] sm:$0xff]
        %v1353 = vld [vmem:[%s8 + $0x18] sm:$0xff]
        %v1354 = vmul.f32 %v1342, %v1342
        %v1355 = vmul.f32 %v1343, %v1343
        %v1356 = vmul.f32 %v1344, %v1344
        %v1357 = vmul.f32 %v1345, %v1345
        %1358 = vmatprep.subr.mxu0 0.0
        %1359 = vmatpush1.msra.mxu0 0.0
        %1360 = vmatprep.subr.mxu0 0.0
        %1361 = vmatpush1.msra.mxu0 0.0
        %1362 = vmatprep.subr.mxu0 0.0
        %1363 = vmatpush1.msra.mxu0 0.0
        %1364 = vmatprep.subr.mxu0 0.0
        %1365 = vmatpush1.msra.mxu0 0.0
        %1366 = vmatprep.subr.mxu0 0.0
        %1367 = vmatpush1.msra.mxu0 0.0
        %1368 = vmatprep.subr.mxu0 0.0
        %1369 = vmatpush1.msra.mxu0 0.0
        %1370 = vmatprep.subr.mxu0 0.0
        %1371 = vmatpush1.msra.mxu0 0.0
        %1372 = vmatprep.subr.mxu0 0.0
        %1373 = vmatpush1.msra.mxu0 0.0
        %1374 = vmatprep.subr.mxu0 0.0
        %1375 = vmatpush1.msra.mxu0 %v1357
        %1376 = vmatprep.subr.mxu0 0.0
        %1377 = vmatpush1.msra.mxu0 %v1356
        %1378 = vmatprep.subr.mxu0 0.0
        %1379 = vmatpush1.msra.mxu0 %v1355
        %1380 = vmatprep.subr.mxu0 0.0
        %1381 = vmatpush1.msra.mxu0 %v1354
        %1382 = vmatprep.subr.mxu0 0.0
        %1383 = vmatpush1.msra.mxu0 %v1345
        %1384 = vmatprep.subr.mxu0 0.0
        %1385 = vmatpush1.msra.mxu0 %v1344
        %1386 = vmatprep.subr.mxu0 0.0
        %1387 = vmatpush1.msra.mxu0 %v1343
        %1388 = vmatprep.subr.mxu0 0.0
        %1389 = vmatpush1.msra.mxu0 %v1342
        %1390 = vmatprep.subr.mxu0 0.0
        %1391 = vmatpush2.msra.mxu0 0.0
        %1392 = vmatprep.subr.mxu0 0.0
        %1393 = vmatpush2.msra.mxu0 0.0
        %1394 = vmatprep.subr.mxu0 0.0
        %1395 = vmatpush2.msra.mxu0 0.0
        %1396 = vmatprep.subr.mxu0 0.0
        %1397 = vmatpush2.msra.mxu0 0.0
        %1398 = vmatprep.subr.mxu0 0.0
        %1399 = vmatpush2.msra.mxu0 0.0
        %1400 = vmatprep.subr.mxu0 0.0
        %1401 = vmatpush2.msra.mxu0 0.0
        %1402 = vmatprep.subr.mxu0 0.0
        %1403 = vmatpush2.msra.mxu0 0.0
        %1404 = vmatprep.subr.mxu0 0.0
        %1405 = vmatpush2.msra.mxu0 0.0
        %1406 = vmatprep.subr.mxu0 0.0
        %1407 = vmatpush2.msra.mxu0 0.0
        %1408 = vmatprep.subr.mxu0 0.0
        %1409 = vmatpush2.msra.mxu0 0.0
        %1410 = vmatprep.subr.mxu0 0.0
        %1411 = vmatpush2.msra.mxu0 0.0
        %1412 = vmatprep.subr.mxu0 0.0
        %1413 = vmatpush2.msra.mxu0 0.0
        %1414 = vmatprep.subr.mxu0 0.0
        %1415 = vmatpush2.msra.mxu0 0.0
        %1416 = vmatprep.subr.mxu0 0.0
        %1417 = vmatpush2.msra.mxu0 0.0
        %1418 = vmatprep.subr.mxu0 0.0
        %1419 = vmatpush2.msra.mxu0 0.0
        %1420 = vmatprep.subr.mxu0 0.0
        %1421 = vmatpush2.msra.mxu0 0.0
        %1422 = vmatprep.mubr.f32.mxu0 0.0
        %1423 = vmatmul.mubr.f32.gmra.mxu0 %v586
        %v1424 = vpop.f32.mrf.mxu0
        %v1425 = vadd.f32 0.0, %v1424
        %v1426 = vpop.f32.mrf.mxu0
        %1427 = vmatprep.mubr.f32.mxu0 0.0
        %1428 = vmatmul.mubr.f32.gmra.mxu0 %v589
        %v1429 = vpop.f32.mrf.mxu0
        %v1430 = vadd.f32 0.0, %v1429
        %v1431 = vpop.f32.mrf.mxu0
        %1432 = vmatprep.mubr.f32.mxu0 0.0
        %1433 = vmatmul.mubr.f32.gmra.mxu0 %v592
        %v1434 = vpop.f32.mrf.mxu0
        %v1435 = vadd.f32 0.0, %v1434
        %v1436 = vpop.f32.mrf.mxu0
        %1437 = vmatprep.mubr.f32.mxu0 0.0
        %1438 = vmatmul.mubr.f32.gmra.mxu0 %v595
        %v1439 = vpop.f32.mrf.mxu0
        %v1440 = vadd.f32 0.0, %v1439
        %v1441 = vpop.f32.mrf.mxu0
        %1442 = vmatprep.mubr.f32.mxu0 0.0
        %1443 = vmatmul.mubr.f32.gmra.mxu0 %v598
        %v1444 = vpop.f32.mrf.mxu0
        %v1445 = vadd.f32 0.0, %v1444
        %v1446 = vpop.f32.mrf.mxu0
        %1447 = vmatprep.mubr.f32.mxu0 0.0
        %1448 = vmatmul.mubr.f32.gmra.mxu0 %v601
        %v1449 = vpop.f32.mrf.mxu0
        %v1450 = vadd.f32 0.0, %v1449
        %v1451 = vpop.f32.mrf.mxu0
        %1452 = vmatprep.mubr.f32.mxu0 0.0
        %1453 = vmatmul.mubr.f32.gmra.mxu0 %v604
        %v1454 = vpop.f32.mrf.mxu0
        %v1455 = vadd.f32 0.0, %v1454
        %v1456 = vpop.f32.mrf.mxu0
        %1457 = vmatprep.mubr.f32.mxu0 0.0
        %1458 = vmatmul.mubr.f32.gmra.mxu0 %v607
        %v1459 = vpop.f32.mrf.mxu0
        %v1460 = vadd.f32 0.0, %v1459
        %v1461 = vpop.f32.mrf.mxu0
        %1462 = vdwg.mxu0
        %v1463 = vsel %vm584, %v1425, 0.0
        %1464 = vadd.xlane.f32.xlu0 %v1463
        %v1465 = vpop.xlane.xlu0 %1464
        %v1466 = vsel %vm584, %v1430, 0.0
        %1467 = vadd.xlane.f32.xlu0 %v1466
        %v1468 = vpop.xlane.xlu0 %1467
        %v1469 = vsel %vm584, %v1435, 0.0
        %1470 = vadd.xlane.f32.xlu0 %v1469
        %v1471 = vpop.xlane.xlu0 %1470
        %v1472 = vsel %vm584, %v1440, 0.0
        %1473 = vadd.xlane.f32.xlu0 %v1472
        %v1474 = vpop.xlane.xlu0 %1473
        %v1475 = vsel %vm584, %v1445, 0.0
        %1476 = vadd.xlane.f32.xlu0 %v1475
        %v1477 = vpop.xlane.xlu0 %1476
        %v1478 = vsel %vm584, %v1450, 0.0
        %1479 = vadd.xlane.f32.xlu0 %v1478
        %v1480 = vpop.xlane.xlu0 %1479
        %v1481 = vsel %vm584, %v1455, 0.0
        %1482 = vadd.xlane.f32.xlu0 %v1481
        %v1483 = vpop.xlane.xlu0 %1482
        %v1484 = vsel %vm584, %v1460, 0.0
        %1485 = vadd.xlane.f32.xlu0 %v1484
        %v1486 = vpop.xlane.xlu0 %1485
        %v1487 = vmul.f32 %v1465, %v1465
        %v1488 = vmul.f32 %v1468, %v1468
        %v1489 = vmul.f32 %v1471, %v1471
        %v1490 = vmul.f32 %v1474, %v1474
        %v1491 = vsub.f32 %v1477, %v1487
        %v1492 = vsub.f32 %v1480, %v1488
        %v1493 = vsub.f32 %v1483, %v1489
        %v1494 = vsub.f32 %v1486, %v1490
        %v1495 = vadd.f32 %v1491, 1e-05
        %v1496 = vadd.f32 %v1492, 1e-05
        %v1497 = vadd.f32 %v1493, 1e-05
        %v1498 = vadd.f32 %v1494, 1e-05
        %v1499 = vrsqrt.pop %v1495
        %v1500 = vrsqrt.pop %v1496
        %v1501 = vrsqrt.pop %v1497
        %v1502 = vrsqrt.pop %v1498
        %v1503 = vsub.f32 %v1342, %v1465
        %v1504 = vsub.f32 %v1343, %v1468
        %v1505 = vsub.f32 %v1344, %v1471
        %v1506 = vsub.f32 %v1345, %v1474
        %v1507 = vmul.f32 %v1503, %v1499
        %v1508 = vmul.f32 %v1504, %v1500
        %v1509 = vmul.f32 %v1505, %v1501
        %v1510 = vmul.f32 %v1506, %v1502
        %1512 = vset.pattern.permute.xlu0 0
        %1513 = vperm.xlu0 %1512, %v1346
        %v1514 = vpop.permute.xlu0 %1513
        %1517 = vset.pattern.permute.xlu0 0
        %1518 = vperm.xlu0 %1517, %v1347
        %v1519 = vpop.permute.xlu0 %1518
        %1522 = vset.pattern.permute.xlu0 0
        %1523 = vperm.xlu0 %1522, %v1348
        %v1524 = vpop.permute.xlu0 %1523
        %1527 = vset.pattern.permute.xlu0 0
        %1528 = vperm.xlu0 %1527, %v1349
        %v1529 = vpop.permute.xlu0 %1528
        %v1531 = vmul.f32 %v1507, %v1514
        %v1532 = vmul.f32 %v1508, %v1519
        %v1533 = vmul.f32 %v1509, %v1524
        %v1534 = vmul.f32 %v1510, %v1529
        %1536 = vset.pattern.permute.xlu0 0
        %1537 = vperm.xlu0 %1536, %v1350
        %v1538 = vpop.permute.xlu0 %1537
        %1541 = vset.pattern.permute.xlu0 0
        %1542 = vperm.xlu0 %1541, %v1351
        %v1543 = vpop.permute.xlu0 %1542
        %1546 = vset.pattern.permute.xlu0 0
        %1547 = vperm.xlu0 %1546, %v1352
        %v1548 = vpop.permute.xlu0 %1547
        %1551 = vset.pattern.permute.xlu0 0
        %1552 = vperm.xlu0 %1551, %v1353
        %v1553 = vpop.permute.xlu0 %1552
        %v1555 = vadd.f32 %v1531, %v1538
        %v1556 = vadd.f32 %v1532, %v1543
        %v1557 = vadd.f32 %v1533, %v1548
        %v1558 = vadd.f32 %v1534, %v1553
        %v1559 = vmax.f32 %v1555, 0.0
        %v1560 = vmax.f32 %v1556, 0.0
        %v1561 = vmax.f32 %v1557, 0.0
        %v1562 = vmax.f32 %v1558, 0.0
        %1563 = vst.msk [vmem:[%s379] sm:$0xff] %vm584, %v1559
        %1564 = vst.msk [vmem:[%s379 + $0x8] sm:$0xff] %vm584, %v1560
        %1565 = vst.msk [vmem:[%s379 + $0x10] sm:$0xff] %vm584, %v1561
        %1566 = vst.msk [vmem:[%s379 + $0x18] sm:$0xff] %vm584, %v1562
        %s1567 = sand.u32 %s269, 1
        %s1568 = scalar_lea.sflag [#allocation3], %s1567
        %s1569 = sand.u32 %s269, 1
        %s1570 = smul.addr %s1569, 32
        %s1571 = scalar_lea.vmem [#allocation2], %s1570
        // Predicated region
        $region65: #{tpu_custom_call.1} parent=63 // pred_check
          %p1572 = pneg %p279
        $region66: #{tpu_custom_call.1} parent=63 // pred_check_branch
          %1574 = sbr.rel (%p1572) target = $region68
        $region67: #{tpu_custom_call.1} parent=63 // pred_region
          %s1576 = ssub.s32 512, 512
          %1577 = vsyncadd %s1568, %s1576
          %s1578 = smul.addr %s25, 4
          %s1579 = smul.addr %s1578, 128
          %s1580 = scalar_lea.hbm %s11, %s1579
          %s1581 = sshll.u32 %s1571, 4
          %s1582 = int_to_ptr.vmem [resolvable:$true] %s1581
          %1587 = dma.vmem_to_hbm [thread:$0]  %s1582, 512, %s1580, %s1568, 128, 128, 8
        $region68: #{tpu_custom_call.1} parent=63 // pred_fallthru
          _
      $region64: #{tpu_custom_call.1} parent=5 // pred_fallthru
        _
      %p1588 = scmp.le.s32.totalorder 2, %s20
      // Predicated region
      $region69: #{tpu_custom_call.1} parent=5 // pred_check
        %p1589 = pneg %p1588
      $region70: #{tpu_custom_call.1} parent=5 // pred_check_branch
        %1591 = sbr.rel (%p1589) target = $region72
      $region71: #{tpu_custom_call.1} parent=5 // pred_region
        %s1592 = ssub.s32 %s20, 2
        // Predicated region
        $region73: #{tpu_custom_call.1} parent=71 // pred_check
          %p1593 = pneg %p285
        $region74: #{tpu_custom_call.1} parent=71 // pred_check_branch
          %1595 = sbr.rel (%p1593) target = $region76
        $region75: #{tpu_custom_call.1} parent=71 // pred_region
          %s1596 = sand.u32 %s270, 1
          %s1597 = scalar_lea.sflag [#allocation3], %s1596
          %s1598 = sand.u32 %s270, 1
          %s1599 = smul.addr %s1598, 32
          %s1600 = scalar_lea.vmem [#allocation2], %s1599
          %1601 = dma.done %s1597, 512
        $region76: #{tpu_custom_call.1} parent=71 // pred_fallthru
          _
      $region72: #{tpu_custom_call.1} parent=5 // pred_fallthru
        _
    $region6: #{tpu_custom_call.1} parent=1 // loop_footer
      %s24 = sadd.s32 1, %s20
    $region7: #{tpu_custom_call.1} parent=1 // loop_footer_branch
      %19 = sbr.rel target = $region3
    $region8: #{tpu_custom_call.1} parent=1 // loop_exit
      _
    %1602 = vsyncpa [#allocation3], 1
    %s1603 = scalar_lea.sflag [#allocation3], 1
    %1604 = vsyncpa %s1603, 1

</llo_original>
